<compile_context>
chip_gen: v7x
topology: tpu7x:2x2x1
jax: 0.10.0
libtpu: 0.0.40
codegen_flags: <defaults>
</compile_context>

<pallas_src>
import functools

import jax
import jax.numpy as jnp
from jax.experimental import pallas as pl
from jax.experimental.pallas import tpu as pltpu  # noqa: F401  (TPU backend import)

N_EMBD = 32
N_HEAD = 4
HEAD_SIZE = N_EMBD // N_HEAD
SEQ = 8
BATCH = 2
EPS = 1e-5


def _layernorm(v, w, b):
    mu = jnp.mean(v, axis=-1, keepdims=True)
    var = jnp.mean((v - mu) ** 2, axis=-1, keepdims=True)
    return (v - mu) * jax.lax.rsqrt(var + EPS) * w + b


def _make_block_kernel(n_head):
    def block_kernel(x_ref, bias_ref, wqkv_ref, wo_ref, bo_ref,
                     w1_ref, b1_ref, w2_ref, b2_ref,
                     ln1w_ref, ln1b_ref, ln2w_ref, ln2b_ref,
                     o_ref):
        x = x_ref[...]                                   # (B*T, C) float32
        n, C = x.shape
        head_size = C // n_head

        # ---- ln1 + fused-QKV multi-head causal self-attention ----
        xn = _layernorm(x, ln1w_ref[0], ln1b_ref[0])
        # softmax scale is pre-folded into the q columns of wqkv.
        qkv = jnp.dot(xn.astype(jnp.bfloat16), wqkv_ref[...],
                      preferred_element_type=jnp.float32)        # (n, 3C)

        bias = bias_ref[...]                             # (n, n) additive causal mask

        # Residual + output-projection bias folded into the accumulator init.
        acc = x + bo_ref[0]
        # TODO(synk): qh/kh/vh are sub-128-lane slices of qkv; whether a VMEM
        # scratch for q/k/v or a single concatenated-heads wo matmul is cheaper
        # needs a bundle dump (count lane-select/relayout ops) to decide.
        for h in range(n_head):
            q0 = h * head_size
            k0 = C + h * head_size
            v0 = 2 * C + h * head_size
            qh = qkv[:, q0:q0 + head_size].astype(jnp.bfloat16)
            kh = qkv[:, k0:k0 + head_size].astype(jnp.bfloat16)
            vh = qkv[:, v0:v0 + head_size].astype(jnp.bfloat16)
            # q @ k^T via dot_general (contract the head dim of both, no transpose op).
            scores = jax.lax.dot_general(
                qh, kh, (((1,), (1,)), ((), ())),
                preferred_element_type=jnp.float32) + bias       # (n, n)
            scores = scores - jnp.max(scores, axis=-1, keepdims=True)
            p = jnp.exp(scores)
            p = p * pl.reciprocal(jnp.sum(p, axis=-1, keepdims=True), approx=True)
            oh = jnp.dot(p.astype(jnp.bfloat16), vh,
                         preferred_element_type=jnp.float32)     # (n, head_size)
            # Per-head output projection accumulated directly (no lane-axis concat);
            # chain kept adjacent so v7x can accumulate in the MRB.
            acc = acc + jnp.dot(oh.astype(jnp.bfloat16), wo_ref[h],
                                preferred_element_type=jnp.float32)
        # TODO(synk): dropout after the attention projection omitted (eval-mode identity).
        x1 = acc

        # ---- ln2 + feed-forward ----
        xn2 = _layernorm(x1, ln2w_ref[0], ln2b_ref[0])
        h1 = jnp.dot(xn2.astype(jnp.bfloat16), w1_ref[...],
                     preferred_element_type=jnp.float32) + b1_ref[0]
        h1 = jnp.maximum(h1, 0.0)
        ff = jnp.dot(h1.astype(jnp.bfloat16), w2_ref[...],
                     preferred_element_type=jnp.float32) + b2_ref[0]
        # TODO(synk): dropout at the end of ffwd omitted (eval-mode identity).
        # TODO(synk): self.bn (BatchNorm1d) is declared in the module but never used
        # in forward, so it is intentionally not implemented.

        o_ref[...] = (x1 + ff).astype(o_ref.dtype)

    return block_kernel


_BLOCK_KERNEL = _make_block_kernel(N_HEAD)


def prepare_block_params(params, batch, seq_len, n_head=N_HEAD):
    """One-time parameter prep: fused/casted weights + precomputed causal bias."""
    C = params["wq"].shape[0]
    head_size = C // n_head
    scale = head_size ** -0.5
    bf = jnp.bfloat16

    # Fuse q/k/v into one (C, 3C) bf16 weight; fold softmax scale into q columns.
    wqkv = jnp.concatenate(
        [params["wq"] * scale, params["wk"], params["wv"]], axis=1).astype(bf)
    # Pre-split output projection per head: (n_head, head_size, C).
    wo = params["wo"].reshape(n_head, head_size, C).astype(bf)

    # Block-diagonal causal additive bias over the flattened (batch*seq) axis:
    # token i attends to token j iff same sequence and j <= i.
    n = batch * seq_len
    row = jnp.arange(n)[:, None]
    col = jnp.arange(n)[None, :]
    allowed = (row // seq_len == col // seq_len) & (col <= row)
    bias = jnp.where(allowed, 0.0, -1e30).astype(jnp.float32)

    return {
        "bias": bias,
        "wqkv": wqkv,
        "wo": wo,
        "bo": params["bo"],
        "w1": params["w1"].astype(bf),
        "b1": params["b1"],
        "w2": params["w2"].astype(bf),
        "b2": params["b2"],
        "ln1_w": params["ln1_w"],
        "ln1_b": params["ln1_b"],
        "ln2_w": params["ln2_w"],
        "ln2_b": params["ln2_b"],
    }


@jax.jit
def transformer_block(x, prep):
    """Hot path: just a reshape + a single collapsed-grid pallas_call."""
    B, T, C = x.shape
    out2d = pl.pallas_call(
        _BLOCK_KERNEL,
        out_shape=jax.ShapeDtypeStruct((B * T, C), x.dtype),
        # No grid / BlockSpecs: the whole problem (~60 KB) is VMEM-resident for a
        # single invocation -> no pipeline re-arm or double-buffered constants.
    )(x.reshape(B * T, C), prep["bias"], prep["wqkv"], prep["wo"], prep["bo"],
      prep["w1"], prep["b1"], prep["w2"], prep["b2"],
      prep["ln1_w"], prep["ln1_b"], prep["ln2_w"], prep["ln2_b"])
    return out2d.reshape(B, T, C)


def make_params(key):
    ks = jax.random.split(key, 9)
    C = N_EMBD
    std = 0.02
    return {
        "wq": jax.random.normal(ks[0], (C, C), jnp.float32) * std,
        "wk": jax.random.normal(ks[1], (C, C), jnp.float32) * std,
        "wv": jax.random.normal(ks[2], (C, C), jnp.float32) * std,
        "wo": jax.random.normal(ks[3], (C, C), jnp.float32) * std,
        "bo": jax.random.normal(ks[4], (1, C), jnp.float32) * std,
        "w1": jax.random.normal(ks[5], (C, 4 * C), jnp.float32) * std,
        "b1": jax.random.normal(ks[6], (1, 4 * C), jnp.float32) * std,
        "w2": jax.random.normal(ks[7], (4 * C, C), jnp.float32) * std,
        "b2": jax.random.normal(ks[8], (1, C), jnp.float32) * std,
        "ln1_w": jnp.ones((1, C), jnp.float32),
        "ln1_b": jnp.zeros((1, C), jnp.float32),
        "ln2_w": jnp.ones((1, C), jnp.float32),
        "ln2_b": jnp.zeros((1, C), jnp.float32),
    }


def reference_block(x, p):
    hi = functools.partial(jnp.dot, precision="highest")

    def ln(v, w, b):
        mu = v.mean(-1, keepdims=True)
        var = ((v - mu) ** 2).mean(-1, keepdims=True)
        return (v - mu) / jnp.sqrt(var + EPS) * w + b

    xn = ln(x, p["ln1_w"][0], p["ln1_b"][0])
    q, k, v = hi(xn, p["wq"]), hi(xn, p["wk"]), hi(xn, p["wv"])
    B, T, C = x.shape
    q = q.reshape(B, T, N_HEAD, HEAD_SIZE).transpose(0, 2, 1, 3)
    k = k.reshape(B, T, N_HEAD, HEAD_SIZE).transpose(0, 2, 1, 3)
    v = v.reshape(B, T, N_HEAD, HEAD_SIZE).transpose(0, 2, 1, 3)
    scores = jnp.einsum("bhtd,bhsd->bhts", q, k, precision="highest") * HEAD_SIZE ** -0.5
    mask = jnp.tril(jnp.ones((T, T), bool))
    scores = jnp.where(mask, scores, -jnp.inf)
    p_att = jax.nn.softmax(scores, axis=-1)
    att = jnp.einsum("bhts,bhsd->bhtd", p_att, v, precision="highest")
    att = att.transpose(0, 2, 1, 3).reshape(B, T, C)
    sa = hi(att, p["wo"]) + p["bo"][0]
    x1 = x + sa
    xn2 = ln(x1, p["ln2_w"][0], p["ln2_b"][0])
    ff = hi(jnp.maximum(hi(xn2, p["w1"]) + p["b1"][0], 0.0), p["w2"]) + p["b2"][0]
    return x1 + ff


if __name__ == "__main__":
    key = jax.random.PRNGKey(0)
    kx, kp = jax.random.split(key)
    x = jax.random.normal(kx, (BATCH, SEQ, N_EMBD), jnp.float32)
    params = make_params(kp)

    # One-time parameter prep (fused bf16 weights, per-head wo, causal bias).
    prep = jax.tree_util.tree_map(jax.block_until_ready,
                                  prepare_block_params(params, BATCH, SEQ))

    out = jax.block_until_ready(transformer_block(x, prep))

    ref = reference_block(x, params)
    assert out.shape == ref.shape
    # bf16 MXU operands (f32 accumulation) + approx softmax reciprocal vs.
    # f32-"highest" reference -> modest tolerance.
    if not jnp.allclose(out, ref, atol=3e-3, rtol=3e-3):
        raise AssertionError(
            f"max abs err = {float(jnp.max(jnp.abs(out - ref)))}")
    print("KERNEL_OK")
</pallas_src>

<mosaic_0001>
module attributes {stable_mosaic.version = 11 : i64} {
  func.func @block_kernel(%arg0: memref<16x32xf32, #tpu.memory_space<vmem>>, %arg1: memref<16x16xf32, #tpu.memory_space<vmem>>, %arg2: memref<32x96xbf16, #tpu.memory_space<vmem>>, %arg3: memref<4x8x32xbf16, #tpu.memory_space<vmem>>, %arg4: memref<1x32xf32, #tpu.memory_space<vmem>>, %arg5: memref<32x128xbf16, #tpu.memory_space<vmem>>, %arg6: memref<1x128xf32, #tpu.memory_space<vmem>>, %arg7: memref<128x32xbf16, #tpu.memory_space<vmem>>, %arg8: memref<1x32xf32, #tpu.memory_space<vmem>>, %arg9: memref<1x32xf32, #tpu.memory_space<vmem>>, %arg10: memref<1x32xf32, #tpu.memory_space<vmem>>, %arg11: memref<1x32xf32, #tpu.memory_space<vmem>>, %arg12: memref<1x32xf32, #tpu.memory_space<vmem>>, %arg13: memref<16x32xf32, #tpu.memory_space<vmem>>) attributes {dimension_semantics = [], scalar_prefetch = 0 : i64, scratch_operands = 0 : i64, tpu.core_type = #tpu.core_type<tc>} {
    %c0 = arith.constant 0 : index
    %c0_0 = arith.constant 0 : index
    %0 = vector.load %arg0[%c0, %c0_0] : memref<16x32xf32, #tpu.memory_space<vmem>>, vector<16x32xf32>
    %c0_1 = arith.constant 0 : index
    %c0_2 = arith.constant 0 : index
    %1 = vector.load %arg9[%c0_1, %c0_2] : memref<1x32xf32, #tpu.memory_space<vmem>>, vector<1x32xf32>
    %2 = vector.shape_cast %1 : vector<1x32xf32> to vector<32xf32>
    %c0_3 = arith.constant 0 : index
    %c0_4 = arith.constant 0 : index
    %3 = vector.load %arg10[%c0_3, %c0_4] : memref<1x32xf32, #tpu.memory_space<vmem>>, vector<1x32xf32>
    %4 = vector.shape_cast %3 : vector<1x32xf32> to vector<32xf32>
    %cst = arith.constant dense<0.000000e+00> : vector<16xf32>
    %5 = vector.multi_reduction <add>, %0, %cst [1] : vector<16x32xf32> to vector<16xf32>
    %6 = vector.shape_cast %5 : vector<16xf32> to vector<16x1xf32>
    %cst_5 = arith.constant 3.200000e+01 : f32
    %7 = vector.broadcast %cst_5 : f32 to vector<16x1xf32>
    %8 = arith.divf %6, %7 : vector<16x1xf32>
    %9 = vector.broadcast %8 : vector<16x1xf32> to vector<16x32xf32>
    %10 = arith.subf %0, %9 : vector<16x32xf32>
    %11 = arith.mulf %10, %10 : vector<16x32xf32>
    %cst_6 = arith.constant dense<0.000000e+00> : vector<16xf32>
    %12 = vector.multi_reduction <add>, %11, %cst_6 [1] : vector<16x32xf32> to vector<16xf32>
    %13 = vector.shape_cast %12 : vector<16xf32> to vector<16x1xf32>
    %cst_7 = arith.constant 3.200000e+01 : f32
    %14 = vector.broadcast %cst_7 : f32 to vector<16x1xf32>
    %15 = arith.divf %13, %14 : vector<16x1xf32>
    %16 = vector.broadcast %8 : vector<16x1xf32> to vector<16x32xf32>
    %17 = arith.subf %0, %16 : vector<16x32xf32>
    %cst_8 = arith.constant 9.99999974E-6 : f32
    %18 = vector.broadcast %cst_8 : f32 to vector<16x1xf32>
    %19 = arith.addf %15, %18 : vector<16x1xf32>
    %20 = math.rsqrt %19 : vector<16x1xf32>
    %21 = vector.broadcast %20 : vector<16x1xf32> to vector<16x32xf32>
    %22 = arith.mulf %17, %21 : vector<16x32xf32>
    %23 = vector.shape_cast %2 : vector<32xf32> to vector<1x32xf32>
    %24 = vector.broadcast %23 : vector<1x32xf32> to vector<16x32xf32>
    %25 = arith.mulf %22, %24 : vector<16x32xf32>
    %26 = vector.shape_cast %4 : vector<32xf32> to vector<1x32xf32>
    %27 = vector.broadcast %26 : vector<1x32xf32> to vector<16x32xf32>
    %28 = arith.addf %25, %27 : vector<16x32xf32>
    %29 = arith.truncf %28 : vector<16x32xf32> to vector<16x32xbf16>
    %c0_9 = arith.constant 0 : index
    %c0_10 = arith.constant 0 : index
    %30 = vector.load %arg2[%c0_9, %c0_10] : memref<32x96xbf16, #tpu.memory_space<vmem>>, vector<32x96xbf16>
    %cst_11 = arith.constant dense<0.000000e+00> : vector<16x96xf32>
    %31 = tpu.matmul %29, %30, %cst_11 {dimension_numbers = #tpu.dot_dimension_numbers<[1], [0], [0], [1], [0, 0, 1, 1], [], []>} : vector<16x32xbf16>, vector<32x96xbf16>, vector<16x96xf32> -> vector<16x96xf32>
    %c0_12 = arith.constant 0 : index
    %c0_13 = arith.constant 0 : index
    %32 = vector.load %arg1[%c0_12, %c0_13] : memref<16x16xf32, #tpu.memory_space<vmem>>, vector<16x16xf32>
    %c0_14 = arith.constant 0 : index
    %c0_15 = arith.constant 0 : index
    %33 = vector.load %arg4[%c0_14, %c0_15] : memref<1x32xf32, #tpu.memory_space<vmem>>, vector<1x32xf32>
    %34 = vector.shape_cast %33 : vector<1x32xf32> to vector<32xf32>
    %35 = vector.shape_cast %34 : vector<32xf32> to vector<1x32xf32>
    %36 = vector.broadcast %35 : vector<1x32xf32> to vector<16x32xf32>
    %37 = arith.addf %0, %36 : vector<16x32xf32>
    %38 = vector.extract_strided_slice %31 {offsets = [0, 0], sizes = [16, 8], strides = [1, 1]} : vector<16x96xf32> to vector<16x8xf32>
    %39 = arith.truncf %38 : vector<16x8xf32> to vector<16x8xbf16>
    %40 = vector.extract_strided_slice %31 {offsets = [0, 32], sizes = [16, 8], strides = [1, 1]} : vector<16x96xf32> to vector<16x8xf32>
    %41 = arith.truncf %40 : vector<16x8xf32> to vector<16x8xbf16>
    %42 = vector.extract_strided_slice %31 {offsets = [0, 64], sizes = [16, 8], strides = [1, 1]} : vector<16x96xf32> to vector<16x8xf32>
    %43 = arith.truncf %42 : vector<16x8xf32> to vector<16x8xbf16>
    %cst_16 = arith.constant dense<0.000000e+00> : vector<16x16xf32>
    %44 = tpu.matmul %39, %41, %cst_16 {dimension_numbers = #tpu.dot_dimension_numbers<[1], [1], [0], [0], [0, 0, 1, 0], [], []>} : vector<16x8xbf16>, vector<16x8xbf16>, vector<16x16xf32> -> vector<16x16xf32>
    %45 = arith.addf %44, %32 : vector<16x16xf32>
    %cst_17 = arith.constant dense<0xFF800000> : vector<16xf32>
    %46 = vector.multi_reduction <maximumf>, %45, %cst_17 [1] : vector<16x16xf32> to vector<16xf32>
    %47 = vector.shape_cast %46 : vector<16xf32> to vector<16x1xf32>
    %48 = vector.broadcast %47 : vector<16x1xf32> to vector<16x16xf32>
    %49 = arith.subf %45, %48 : vector<16x16xf32>
    %50 = math.exp %49 : vector<16x16xf32>
    %cst_18 = arith.constant dense<0.000000e+00> : vector<16xf32>
    %51 = vector.multi_reduction <add>, %50, %cst_18 [1] : vector<16x16xf32> to vector<16xf32>
    %52 = vector.shape_cast %51 : vector<16xf32> to vector<16x1xf32>
    %53 = tpu.reciprocal %52 {approx = true} : vector<16x1xf32> -> vector<16x1xf32>
    %54 = vector.broadcast %53 : vector<16x1xf32> to vector<16x16xf32>
    %55 = arith.mulf %50, %54 : vector<16x16xf32>
    %56 = arith.truncf %55 : vector<16x16xf32> to vector<16x16xbf16>
    %cst_19 = arith.constant dense<0.000000e+00> : vector<16x8xf32>
    %57 = tpu.matmul %56, %43, %cst_19 {dimension_numbers = #tpu.dot_dimension_numbers<[1], [0], [0], [1], [0, 0, 1, 1], [], []>} : vector<16x16xbf16>, vector<16x8xbf16>, vector<16x8xf32> -> vector<16x8xf32>
    %58 = arith.truncf %57 : vector<16x8xf32> to vector<16x8xbf16>
    %c0_20 = arith.constant 0 : index
    %c0_21 = arith.constant 0 : index
    %c0_22 = arith.constant 0 : index
    %59 = vector.load %arg3[%c0_20, %c0_21, %c0_22] : memref<4x8x32xbf16, #tpu.memory_space<vmem>>, vector<1x8x32xbf16>
    %60 = vector.shape_cast %59 : vector<1x8x32xbf16> to vector<8x32xbf16>
    %cst_23 = arith.constant dense<0.000000e+00> : vector<16x32xf32>
    %61 = tpu.matmul %58, %60, %cst_23 {dimension_numbers = #tpu.dot_dimension_numbers<[1], [0], [0], [1], [0, 0, 1, 1], [], []>} : vector<16x8xbf16>, vector<8x32xbf16>, vector<16x32xf32> -> vector<16x32xf32>
    %62 = arith.addf %37, %61 : vector<16x32xf32>
    %63 = vector.extract_strided_slice %31 {offsets = [0, 8], sizes = [16, 8], strides = [1, 1]} : vector<16x96xf32> to vector<16x8xf32>
    %64 = arith.truncf %63 : vector<16x8xf32> to vector<16x8xbf16>
    %65 = vector.extract_strided_slice %31 {offsets = [0, 40], sizes = [16, 8], strides = [1, 1]} : vector<16x96xf32> to vector<16x8xf32>
    %66 = arith.truncf %65 : vector<16x8xf32> to vector<16x8xbf16>
    %67 = vector.extract_strided_slice %31 {offsets = [0, 72], sizes = [16, 8], strides = [1, 1]} : vector<16x96xf32> to vector<16x8xf32>
    %68 = arith.truncf %67 : vector<16x8xf32> to vector<16x8xbf16>
    %cst_24 = arith.constant dense<0.000000e+00> : vector<16x16xf32>
    %69 = tpu.matmul %64, %66, %cst_24 {dimension_numbers = #tpu.dot_dimension_numbers<[1], [1], [0], [0], [0, 0, 1, 0], [], []>} : vector<16x8xbf16>, vector<16x8xbf16>, vector<16x16xf32> -> vector<16x16xf32>
    %70 = arith.addf %69, %32 : vector<16x16xf32>
    %cst_25 = arith.constant dense<0xFF800000> : vector<16xf32>
    %71 = vector.multi_reduction <maximumf>, %70, %cst_25 [1] : vector<16x16xf32> to vector<16xf32>
    %72 = vector.shape_cast %71 : vector<16xf32> to vector<16x1xf32>
    %73 = vector.broadcast %72 : vector<16x1xf32> to vector<16x16xf32>
    %74 = arith.subf %70, %73 : vector<16x16xf32>
    %75 = math.exp %74 : vector<16x16xf32>
    %cst_26 = arith.constant dense<0.000000e+00> : vector<16xf32>
    %76 = vector.multi_reduction <add>, %75, %cst_26 [1] : vector<16x16xf32> to vector<16xf32>
    %77 = vector.shape_cast %76 : vector<16xf32> to vector<16x1xf32>
    %78 = tpu.reciprocal %77 {approx = true} : vector<16x1xf32> -> vector<16x1xf32>
    %79 = vector.broadcast %78 : vector<16x1xf32> to vector<16x16xf32>
    %80 = arith.mulf %75, %79 : vector<16x16xf32>
    %81 = arith.truncf %80 : vector<16x16xf32> to vector<16x16xbf16>
    %cst_27 = arith.constant dense<0.000000e+00> : vector<16x8xf32>
    %82 = tpu.matmul %81, %68, %cst_27 {dimension_numbers = #tpu.dot_dimension_numbers<[1], [0], [0], [1], [0, 0, 1, 1], [], []>} : vector<16x16xbf16>, vector<16x8xbf16>, vector<16x8xf32> -> vector<16x8xf32>
    %83 = arith.truncf %82 : vector<16x8xf32> to vector<16x8xbf16>
    %c1 = arith.constant 1 : index
    %c0_28 = arith.constant 0 : index
    %c0_29 = arith.constant 0 : index
    %84 = vector.load %arg3[%c1, %c0_28, %c0_29] : memref<4x8x32xbf16, #tpu.memory_space<vmem>>, vector<1x8x32xbf16>
    %85 = vector.shape_cast %84 : vector<1x8x32xbf16> to vector<8x32xbf16>
    %cst_30 = arith.constant dense<0.000000e+00> : vector<16x32xf32>
    %86 = tpu.matmul %83, %85, %cst_30 {dimension_numbers = #tpu.dot_dimension_numbers<[1], [0], [0], [1], [0, 0, 1, 1], [], []>} : vector<16x8xbf16>, vector<8x32xbf16>, vector<16x32xf32> -> vector<16x32xf32>
    %87 = arith.addf %62, %86 : vector<16x32xf32>
    %88 = vector.extract_strided_slice %31 {offsets = [0, 16], sizes = [16, 8], strides = [1, 1]} : vector<16x96xf32> to vector<16x8xf32>
    %89 = arith.truncf %88 : vector<16x8xf32> to vector<16x8xbf16>
    %90 = vector.extract_strided_slice %31 {offsets = [0, 48], sizes = [16, 8], strides = [1, 1]} : vector<16x96xf32> to vector<16x8xf32>
    %91 = arith.truncf %90 : vector<16x8xf32> to vector<16x8xbf16>
    %92 = vector.extract_strided_slice %31 {offsets = [0, 80], sizes = [16, 8], strides = [1, 1]} : vector<16x96xf32> to vector<16x8xf32>
    %93 = arith.truncf %92 : vector<16x8xf32> to vector<16x8xbf16>
    %cst_31 = arith.constant dense<0.000000e+00> : vector<16x16xf32>
    %94 = tpu.matmul %89, %91, %cst_31 {dimension_numbers = #tpu.dot_dimension_numbers<[1], [1], [0], [0], [0, 0, 1, 0], [], []>} : vector<16x8xbf16>, vector<16x8xbf16>, vector<16x16xf32> -> vector<16x16xf32>
    %95 = arith.addf %94, %32 : vector<16x16xf32>
    %cst_32 = arith.constant dense<0xFF800000> : vector<16xf32>
    %96 = vector.multi_reduction <maximumf>, %95, %cst_32 [1] : vector<16x16xf32> to vector<16xf32>
    %97 = vector.shape_cast %96 : vector<16xf32> to vector<16x1xf32>
    %98 = vector.broadcast %97 : vector<16x1xf32> to vector<16x16xf32>
    %99 = arith.subf %95, %98 : vector<16x16xf32>
    %100 = math.exp %99 : vector<16x16xf32>
    %cst_33 = arith.constant dense<0.000000e+00> : vector<16xf32>
    %101 = vector.multi_reduction <add>, %100, %cst_33 [1] : vector<16x16xf32> to vector<16xf32>
    %102 = vector.shape_cast %101 : vector<16xf32> to vector<16x1xf32>
    %103 = tpu.reciprocal %102 {approx = true} : vector<16x1xf32> -> vector<16x1xf32>
    %104 = vector.broadcast %103 : vector<16x1xf32> to vector<16x16xf32>
    %105 = arith.mulf %100, %104 : vector<16x16xf32>
    %106 = arith.truncf %105 : vector<16x16xf32> to vector<16x16xbf16>
    %cst_34 = arith.constant dense<0.000000e+00> : vector<16x8xf32>
    %107 = tpu.matmul %106, %93, %cst_34 {dimension_numbers = #tpu.dot_dimension_numbers<[1], [0], [0], [1], [0, 0, 1, 1], [], []>} : vector<16x16xbf16>, vector<16x8xbf16>, vector<16x8xf32> -> vector<16x8xf32>
    %108 = arith.truncf %107 : vector<16x8xf32> to vector<16x8xbf16>
    %c2 = arith.constant 2 : index
    %c0_35 = arith.constant 0 : index
    %c0_36 = arith.constant 0 : index
    %109 = vector.load %arg3[%c2, %c0_35, %c0_36] : memref<4x8x32xbf16, #tpu.memory_space<vmem>>, vector<1x8x32xbf16>
    %110 = vector.shape_cast %109 : vector<1x8x32xbf16> to vector<8x32xbf16>
    %cst_37 = arith.constant dense<0.000000e+00> : vector<16x32xf32>
    %111 = tpu.matmul %108, %110, %cst_37 {dimension_numbers = #tpu.dot_dimension_numbers<[1], [0], [0], [1], [0, 0, 1, 1], [], []>} : vector<16x8xbf16>, vector<8x32xbf16>, vector<16x32xf32> -> vector<16x32xf32>
    %112 = arith.addf %87, %111 : vector<16x32xf32>
    %113 = vector.extract_strided_slice %31 {offsets = [0, 24], sizes = [16, 8], strides = [1, 1]} : vector<16x96xf32> to vector<16x8xf32>
    %114 = arith.truncf %113 : vector<16x8xf32> to vector<16x8xbf16>
    %115 = vector.extract_strided_slice %31 {offsets = [0, 56], sizes = [16, 8], strides = [1, 1]} : vector<16x96xf32> to vector<16x8xf32>
    %116 = arith.truncf %115 : vector<16x8xf32> to vector<16x8xbf16>
    %117 = vector.extract_strided_slice %31 {offsets = [0, 88], sizes = [16, 8], strides = [1, 1]} : vector<16x96xf32> to vector<16x8xf32>
    %118 = arith.truncf %117 : vector<16x8xf32> to vector<16x8xbf16>
    %cst_38 = arith.constant dense<0.000000e+00> : vector<16x16xf32>
    %119 = tpu.matmul %114, %116, %cst_38 {dimension_numbers = #tpu.dot_dimension_numbers<[1], [1], [0], [0], [0, 0, 1, 0], [], []>} : vector<16x8xbf16>, vector<16x8xbf16>, vector<16x16xf32> -> vector<16x16xf32>
    %120 = arith.addf %119, %32 : vector<16x16xf32>
    %cst_39 = arith.constant dense<0xFF800000> : vector<16xf32>
    %121 = vector.multi_reduction <maximumf>, %120, %cst_39 [1] : vector<16x16xf32> to vector<16xf32>
    %122 = vector.shape_cast %121 : vector<16xf32> to vector<16x1xf32>
    %123 = vector.broadcast %122 : vector<16x1xf32> to vector<16x16xf32>
    %124 = arith.subf %120, %123 : vector<16x16xf32>
    %125 = math.exp %124 : vector<16x16xf32>
    %cst_40 = arith.constant dense<0.000000e+00> : vector<16xf32>
    %126 = vector.multi_reduction <add>, %125, %cst_40 [1] : vector<16x16xf32> to vector<16xf32>
    %127 = vector.shape_cast %126 : vector<16xf32> to vector<16x1xf32>
    %128 = tpu.reciprocal %127 {approx = true} : vector<16x1xf32> -> vector<16x1xf32>
    %129 = vector.broadcast %128 : vector<16x1xf32> to vector<16x16xf32>
    %130 = arith.mulf %125, %129 : vector<16x16xf32>
    %131 = arith.truncf %130 : vector<16x16xf32> to vector<16x16xbf16>
    %cst_41 = arith.constant dense<0.000000e+00> : vector<16x8xf32>
    %132 = tpu.matmul %131, %118, %cst_41 {dimension_numbers = #tpu.dot_dimension_numbers<[1], [0], [0], [1], [0, 0, 1, 1], [], []>} : vector<16x16xbf16>, vector<16x8xbf16>, vector<16x8xf32> -> vector<16x8xf32>
    %133 = arith.truncf %132 : vector<16x8xf32> to vector<16x8xbf16>
    %c3 = arith.constant 3 : index
    %c0_42 = arith.constant 0 : index
    %c0_43 = arith.constant 0 : index
    %134 = vector.load %arg3[%c3, %c0_42, %c0_43] : memref<4x8x32xbf16, #tpu.memory_space<vmem>>, vector<1x8x32xbf16>
    %135 = vector.shape_cast %134 : vector<1x8x32xbf16> to vector<8x32xbf16>
    %cst_44 = arith.constant dense<0.000000e+00> : vector<16x32xf32>
    %136 = tpu.matmul %133, %135, %cst_44 {dimension_numbers = #tpu.dot_dimension_numbers<[1], [0], [0], [1], [0, 0, 1, 1], [], []>} : vector<16x8xbf16>, vector<8x32xbf16>, vector<16x32xf32> -> vector<16x32xf32>
    %137 = arith.addf %112, %136 : vector<16x32xf32>
    %c0_45 = arith.constant 0 : index
    %c0_46 = arith.constant 0 : index
    %138 = vector.load %arg11[%c0_45, %c0_46] : memref<1x32xf32, #tpu.memory_space<vmem>>, vector<1x32xf32>
    %139 = vector.shape_cast %138 : vector<1x32xf32> to vector<32xf32>
    %c0_47 = arith.constant 0 : index
    %c0_48 = arith.constant 0 : index
    %140 = vector.load %arg12[%c0_47, %c0_48] : memref<1x32xf32, #tpu.memory_space<vmem>>, vector<1x32xf32>
    %141 = vector.shape_cast %140 : vector<1x32xf32> to vector<32xf32>
    %cst_49 = arith.constant dense<0.000000e+00> : vector<16xf32>
    %142 = vector.multi_reduction <add>, %137, %cst_49 [1] : vector<16x32xf32> to vector<16xf32>
    %143 = vector.shape_cast %142 : vector<16xf32> to vector<16x1xf32>
    %cst_50 = arith.constant 3.200000e+01 : f32
    %144 = vector.broadcast %cst_50 : f32 to vector<16x1xf32>
    %145 = arith.divf %143, %144 : vector<16x1xf32>
    %146 = vector.broadcast %145 : vector<16x1xf32> to vector<16x32xf32>
    %147 = arith.subf %137, %146 : vector<16x32xf32>
    %148 = arith.mulf %147, %147 : vector<16x32xf32>
    %cst_51 = arith.constant dense<0.000000e+00> : vector<16xf32>
    %149 = vector.multi_reduction <add>, %148, %cst_51 [1] : vector<16x32xf32> to vector<16xf32>
    %150 = vector.shape_cast %149 : vector<16xf32> to vector<16x1xf32>
    %cst_52 = arith.constant 3.200000e+01 : f32
    %151 = vector.broadcast %cst_52 : f32 to vector<16x1xf32>
    %152 = arith.divf %150, %151 : vector<16x1xf32>
    %153 = vector.broadcast %145 : vector<16x1xf32> to vector<16x32xf32>
    %154 = arith.subf %137, %153 : vector<16x32xf32>
    %cst_53 = arith.constant 9.99999974E-6 : f32
    %155 = vector.broadcast %cst_53 : f32 to vector<16x1xf32>
    %156 = arith.addf %152, %155 : vector<16x1xf32>
    %157 = math.rsqrt %156 : vector<16x1xf32>
    %158 = vector.broadcast %157 : vector<16x1xf32> to vector<16x32xf32>
    %159 = arith.mulf %154, %158 : vector<16x32xf32>
    %160 = vector.shape_cast %139 : vector<32xf32> to vector<1x32xf32>
    %161 = vector.broadcast %160 : vector<1x32xf32> to vector<16x32xf32>
    %162 = arith.mulf %159, %161 : vector<16x32xf32>
    %163 = vector.shape_cast %141 : vector<32xf32> to vector<1x32xf32>
    %164 = vector.broadcast %163 : vector<1x32xf32> to vector<16x32xf32>
    %165 = arith.addf %162, %164 : vector<16x32xf32>
    %166 = arith.truncf %165 : vector<16x32xf32> to vector<16x32xbf16>
    %c0_54 = arith.constant 0 : index
    %c0_55 = arith.constant 0 : index
    %167 = vector.load %arg5[%c0_54, %c0_55] : memref<32x128xbf16, #tpu.memory_space<vmem>>, vector<32x128xbf16>
    %cst_56 = arith.constant dense<0.000000e+00> : vector<16x128xf32>
    %168 = tpu.matmul %166, %167, %cst_56 {dimension_numbers = #tpu.dot_dimension_numbers<[1], [0], [0], [1], [0, 0, 1, 1], [], []>} : vector<16x32xbf16>, vector<32x128xbf16>, vector<16x128xf32> -> vector<16x128xf32>
    %c0_57 = arith.constant 0 : index
    %c0_58 = arith.constant 0 : index
    %169 = vector.load %arg6[%c0_57, %c0_58] : memref<1x128xf32, #tpu.memory_space<vmem>>, vector<1x128xf32>
    %170 = vector.shape_cast %169 : vector<1x128xf32> to vector<128xf32>
    %171 = vector.shape_cast %170 : vector<128xf32> to vector<1x128xf32>
    %172 = vector.broadcast %171 : vector<1x128xf32> to vector<16x128xf32>
    %173 = arith.addf %168, %172 : vector<16x128xf32>
    %cst_59 = arith.constant 0.000000e+00 : f32
    %174 = vector.broadcast %cst_59 : f32 to vector<16x128xf32>
    %175 = arith.maximumf %173, %174 : vector<16x128xf32>
    %176 = arith.truncf %175 : vector<16x128xf32> to vector<16x128xbf16>
    %c0_60 = arith.constant 0 : index
    %c0_61 = arith.constant 0 : index
    %177 = vector.load %arg7[%c0_60, %c0_61] : memref<128x32xbf16, #tpu.memory_space<vmem>>, vector<128x32xbf16>
    %cst_62 = arith.constant dense<0.000000e+00> : vector<16x32xf32>
    %178 = tpu.matmul %176, %177, %cst_62 {dimension_numbers = #tpu.dot_dimension_numbers<[1], [0], [0], [1], [0, 0, 1, 1], [], []>} : vector<16x128xbf16>, vector<128x32xbf16>, vector<16x32xf32> -> vector<16x32xf32>
    %c0_63 = arith.constant 0 : index
    %c0_64 = arith.constant 0 : index
    %179 = vector.load %arg8[%c0_63, %c0_64] : memref<1x32xf32, #tpu.memory_space<vmem>>, vector<1x32xf32>
    %180 = vector.shape_cast %179 : vector<1x32xf32> to vector<32xf32>
    %181 = vector.shape_cast %180 : vector<32xf32> to vector<1x32xf32>
    %182 = vector.broadcast %181 : vector<1x32xf32> to vector<16x32xf32>
    %183 = arith.addf %178, %182 : vector<16x32xf32>
    %184 = arith.addf %137, %183 : vector<16x32xf32>
    %c0_65 = arith.constant 0 : index
    %c0_66 = arith.constant 0 : index
    %185 = vector.load %arg13[%c0_65, %c0_66] : memref<16x32xf32, #tpu.memory_space<vmem>>, vector<16x32xf32>
    tpu.vector_store %arg13[%c0_65, %c0_66], %184 {strides = array<i32>} : memref<16x32xf32, #tpu.memory_space<vmem>>, vector<16x32xf32>,
    return
  }
}

</mosaic_0001>

<llo_original>
// kernel: transformer_block.1
$region0: #{transformer_block.1}
  #allocation0 [shape = 'u32[]', space=smem, size = 0x4, offset = 0x4, fixed_abs, tag = 'smem constant byte address 0x4 - core index']
  #allocation1 [shape = 'u32[144,128]{1,0:T(1,128)}', space=vmem, size = 0x12000, scoped, tag = 'internal scratch']
  %s0 = inlined_call_operand.vmem [shape: f32[16,32], index: 0, kind: input, shape index: {}]
  %s1 = inlined_call_operand.vmem [shape: f32[16,16], index: 1, kind: input, shape index: {}]
  %s2 = inlined_call_operand.vmem [shape: bf16[32,96], index: 2, kind: input, shape index: {}]
  %s3 = inlined_call_operand.vmem [shape: bf16[4,8,32], index: 3, kind: input, shape index: {}]
  %s4 = inlined_call_operand.vmem [shape: f32[1,32], index: 4, kind: input, shape index: {}]
  %s5 = inlined_call_operand.vmem [shape: bf16[32,128], index: 5, kind: input, shape index: {}]
  %s6 = inlined_call_operand.vmem [shape: f32[1,128], index: 6, kind: input, shape index: {}]
  %s7 = inlined_call_operand.vmem [shape: bf16[128,32], index: 7, kind: input, shape index: {}]
  %s8 = inlined_call_operand.vmem [shape: f32[1,32], index: 8, kind: input, shape index: {}]
  %s9 = inlined_call_operand.vmem [shape: f32[1,32], index: 9, kind: input, shape index: {}]
  %s10 = inlined_call_operand.vmem [shape: f32[1,32], index: 10, kind: input, shape index: {}]
  %s11 = inlined_call_operand.vmem [shape: f32[1,32], index: 11, kind: input, shape index: {}]
  %s12 = inlined_call_operand.vmem [shape: f32[1,32], index: 12, kind: input, shape index: {}]
  %s13 = inlined_call_operand.hbm [shape: f32[16,32], index: 13, kind: output, shape index: {}]
  %s14 = sld [smem:[#allocation0]]
  $region62: #{transformer_block.1} parent=0
    _
  %s16 = ssub.s32 1, %s14
  %s17 = scalar_select 0, %s16, %s14
  $region1: #{transformer_block.1} parent=0
    #allocation2 [shape = 'u8[8192]{0}', space=vmem, size = 0x2000, scoped, tag = 'output window, operand 0, single buffered']
    #allocation3 [shape = 's32[1]{0}', space=sflag, size = 0x4, scoped, tag = 'scoped memory for transformer_block.1']
    %18 = vsyncpa [#allocation3], 0
    // Predicated region
    $region2: #{transformer_block.1} parent=1 // pred_check
      _
    $region3: #{transformer_block.1} parent=1 // pred_check_branch
      %20 = sbr.rel (0) target = $region5
    $region4: #{transformer_block.1} parent=1 // pred_region
      _
    $region5: #{transformer_block.1} parent=1 // pred_fallthru
      _
    // Predicated region
    $region6: #{transformer_block.1} parent=1 // pred_check
      _
    $region7: #{transformer_block.1} parent=1 // pred_check_branch
      %22 = sbr.rel (0) target = $region9
    $region8: #{transformer_block.1} parent=1 // pred_region
      _
    $region9: #{transformer_block.1} parent=1 // pred_fallthru
      _
    // Predicated region
    $region10: #{transformer_block.1} parent=1 // pred_check
      _
    $region11: #{transformer_block.1} parent=1 // pred_check_branch
      %24 = sbr.rel (0) target = $region13
    $region12: #{transformer_block.1} parent=1 // pred_region
      _
    $region13: #{transformer_block.1} parent=1 // pred_fallthru
      _
    // Predicated region
    $region14: #{transformer_block.1} parent=1 // pred_check
      _
    $region15: #{transformer_block.1} parent=1 // pred_check_branch
      %26 = sbr.rel (0) target = $region17
    $region16: #{transformer_block.1} parent=1 // pred_region
      _
    $region17: #{transformer_block.1} parent=1 // pred_fallthru
      _
    // Predicated region
    $region18: #{transformer_block.1} parent=1 // pred_check
      _
    $region19: #{transformer_block.1} parent=1 // pred_check_branch
      %28 = sbr.rel (0) target = $region21
    $region20: #{transformer_block.1} parent=1 // pred_region
      _
    $region21: #{transformer_block.1} parent=1 // pred_fallthru
      _
    // Predicated region
    $region22: #{transformer_block.1} parent=1 // pred_check
      _
    $region23: #{transformer_block.1} parent=1 // pred_check_branch
      %30 = sbr.rel (0) target = $region25
    $region24: #{transformer_block.1} parent=1 // pred_region
      _
    $region25: #{transformer_block.1} parent=1 // pred_fallthru
      _
    // Predicated region
    $region26: #{transformer_block.1} parent=1 // pred_check
      _
    $region27: #{transformer_block.1} parent=1 // pred_check_branch
      %32 = sbr.rel (0) target = $region29
    $region28: #{transformer_block.1} parent=1 // pred_region
      _
    $region29: #{transformer_block.1} parent=1 // pred_fallthru
      _
    // Predicated region
    $region30: #{transformer_block.1} parent=1 // pred_check
      _
    $region31: #{transformer_block.1} parent=1 // pred_check_branch
      %34 = sbr.rel (0) target = $region33
    $region32: #{transformer_block.1} parent=1 // pred_region
      _
    $region33: #{transformer_block.1} parent=1 // pred_fallthru
      _
    // Predicated region
    $region34: #{transformer_block.1} parent=1 // pred_check
      _
    $region35: #{transformer_block.1} parent=1 // pred_check_branch
      %36 = sbr.rel (0) target = $region37
    $region36: #{transformer_block.1} parent=1 // pred_region
      _
    $region37: #{transformer_block.1} parent=1 // pred_fallthru
      _
    // Predicated region
    $region38: #{transformer_block.1} parent=1 // pred_check
      _
    $region39: #{transformer_block.1} parent=1 // pred_check_branch
      %38 = sbr.rel (0) target = $region41
    $region40: #{transformer_block.1} parent=1 // pred_region
      _
    $region41: #{transformer_block.1} parent=1 // pred_fallthru
      _
    // Predicated region
    $region42: #{transformer_block.1} parent=1 // pred_check
      _
    $region43: #{transformer_block.1} parent=1 // pred_check_branch
      %40 = sbr.rel (0) target = $region45
    $region44: #{transformer_block.1} parent=1 // pred_region
      _
    $region45: #{transformer_block.1} parent=1 // pred_fallthru
      _
    // Predicated region
    $region46: #{transformer_block.1} parent=1 // pred_check
      _
    $region47: #{transformer_block.1} parent=1 // pred_check_branch
      %42 = sbr.rel (0) target = $region49
    $region48: #{transformer_block.1} parent=1 // pred_region
      _
    $region49: #{transformer_block.1} parent=1 // pred_fallthru
      _
    // Predicated region
    $region50: #{transformer_block.1} parent=1 // pred_check
      _
    $region51: #{transformer_block.1} parent=1 // pred_check_branch
      %44 = sbr.rel (0) target = $region53
    $region52: #{transformer_block.1} parent=1 // pred_region
      _
    $region53: #{transformer_block.1} parent=1 // pred_fallthru
      _
    %v46 = vld [vmem:[%s0] sm:$0xff]
    %v47 = vld [vmem:[%s0 + $0x8] sm:$0xff]
    %v48 = vld [vmem:[%s9] sm:$0x1]
    %v49 = vld [vmem:[%s10] sm:$0x1]
    %vm50 = vcmask 261120
    %v51 = vsel %vm50, %v46, 0.0
    %52 = vadd.xlane.f32.xlu0 %v51
    %v53 = vpop.xlane.xlu0 %52
    %v54 = vsel %vm50, %v47, 0.0
    %55 = vadd.xlane.f32.xlu0 %v54
    %v56 = vpop.xlane.xlu0 %55
    %v57 = vrcp.pop 32.0
    %v58 = vmul.f32 %v53, %v57
    %v59 = vmul.f32 %v56, %v57
    %v60 = vsub.f32 %v46, %v58
    %v61 = vsub.f32 %v47, %v59
    %v62 = vmul.f32 %v60, %v60
    %v63 = vmul.f32 %v61, %v61
    %v64 = vsel %vm50, %v62, 0.0
    %65 = vadd.xlane.f32.xlu0 %v64
    %v66 = vpop.xlane.xlu0 %65
    %v67 = vsel %vm50, %v63, 0.0
    %68 = vadd.xlane.f32.xlu0 %v67
    %v69 = vpop.xlane.xlu0 %68
    %v70 = vmul.f32 %v66, %v57
    %v71 = vmul.f32 %v69, %v57
    %v72 = vadd.f32 %v70, 1e-05
    %v73 = vadd.f32 %v71, 1e-05
    %v74 = vrsqrt.pop %v72
    %v75 = vrsqrt.pop %v73
    %v76 = vmul.f32 %v60, %v74
    %v77 = vmul.f32 %v61, %v75
    %v79 = vlaneseq
    %v80 = vshrl.u32 %v79, 7
    %v81 = vsub.s32 0, %v80
    %v82 = vrot.slane %v48, %v81
    %v84 = vmul.f32 %v76, %v82
    %v85 = vmul.f32 %v77, %v82
    %v87 = vlaneseq
    %v88 = vshrl.u32 %v87, 7
    %v89 = vsub.s32 0, %v88
    %v90 = vrot.slane %v49, %v89
    %v92 = vadd.f32 %v84, %v90
    %v93 = vadd.f32 %v85, %v90
    %v94 = vpack.c.bf16 %v93, %v92
    %v95 = vld [vmem:[%s2] sm:$0xf]
    %v96 = vld [vmem:[%s2 + $0x4] sm:$0xf]
    %v97 = vld [vmem:[%s2 + $0x8] sm:$0xf]
    %v98 = vld [vmem:[%s2 + $0xc] sm:$0xf]
    %v103 = vunpack.c.l.b16 %v95
    %v104 = vunpack.c.l.b16 %v96
    %v105 = vunpack.c.l.b16 %v97
    %v106 = vunpack.c.l.b16 %v98
    %v107 = vpack.c.b16 %v104, %v103
    %v108 = vpack.c.b16 %v106, %v105
    %v112 = vsel %vm50, %v94, 0
    %114 = vmatprep.subr.bf16.mxu0 0
    %115 = vmatpush1.bf16.msra.mxu0 %v107
    %116 = vmatprep.subr.bf16.mxu0 0
    %117 = vmatpush1.bf16.msra.mxu0 %v108
    %118 = vmatprep.subr.bf16.mxu0 0
    %119 = vmatpush1.bf16.msra.mxu0 0
    %120 = vmatprep.subr.bf16.mxu0 0
    %121 = vmatpush1.bf16.msra.mxu0 0
    %122 = vmatprep.subr.bf16.mxu0 0
    %123 = vmatpush1.bf16.msra.mxu0 0
    %124 = vmatprep.subr.bf16.mxu0 0
    %125 = vmatpush1.bf16.msra.mxu0 0
    %126 = vmatprep.subr.bf16.mxu0 0
    %127 = vmatpush1.bf16.msra.mxu0 0
    %128 = vmatprep.subr.bf16.mxu0 0
    %129 = vmatpush1.bf16.msra.mxu0 0
    %130 = vmatprep.subr.bf16.mxu0 0
    %131 = vmatpush1.bf16.msra.mxu0 0
    %132 = vmatprep.subr.bf16.mxu0 0
    %133 = vmatpush1.bf16.msra.mxu0 0
    %134 = vmatprep.subr.bf16.mxu0 0
    %135 = vmatpush1.bf16.msra.mxu0 0
    %136 = vmatprep.subr.bf16.mxu0 0
    %137 = vmatpush1.bf16.msra.mxu0 0
    %138 = vmatprep.subr.bf16.mxu0 0
    %139 = vmatpush1.bf16.msra.mxu0 0
    %140 = vmatprep.subr.bf16.mxu0 0
    %141 = vmatpush1.bf16.msra.mxu0 0
    %142 = vmatprep.subr.bf16.mxu0 0
    %143 = vmatpush1.bf16.msra.mxu0 0
    %144 = vmatprep.subr.bf16.mxu0 0
    %145 = vmatpush1.bf16.msra.mxu0 0
    %146 = vmatprep.mubr.bf16.mxu0 0
    %147 = vmatmul.mubr.bf16.gmra.mrb[0].mxu0 %v112
    %v148 = vpop.f32.mrb[0].mxu0
    %v149 = vadd.f32 0.0, %v148
    %v150 = vpop.f32.mrb[0].mxu0
    %v151 = vpop.f32.mrb[0].mxu0
    %v152 = vadd.f32 0.0, %v151
    %v153 = vpop.f32.mrb[0].mxu0
    %154 = vdwg.mxu0
    %v155 = vld [vmem:[%s1] sm:$0xff]
    %v156 = vld [vmem:[%s1 + $0x8] sm:$0xff]
    %v157 = vld [vmem:[%s4] sm:$0x1]
    %v159 = vlaneseq
    %v160 = vshrl.u32 %v159, 7
    %v161 = vsub.s32 0, %v160
    %v162 = vrot.slane %v157, %v161
    %v164 = vadd.f32 %v46, %v162
    %v165 = vadd.f32 %v47, %v162
    %v166 = vpack.c.bf16 %v152, %v149
    %168 = vrot.lane.b32.xlu0 %v166, 96
    %v169 = vpop.permute.xlu0 %168
    %vm170 = vcmask 64512
    %v172 = vsel %vm170, %v166, 0
    %v175 = vsel %vm170, %v169, 0
    %177 = vmatprep.subr.bf16.mxu0 0
    %178 = vmatpush1.bf16.xpose.msra.mxu0 %v175
    %179 = vmatprep.subr.bf16.mxu0 0
    %180 = vmatpush1.bf16.xpose.msra.mxu0 0
    %181 = vmatprep.subr.bf16.mxu0 0
    %182 = vmatpush1.bf16.xpose.msra.mxu0 0
    %183 = vmatprep.subr.bf16.mxu0 0
    %184 = vmatpush1.bf16.xpose.msra.mxu0 0
    %185 = vmatprep.subr.bf16.mxu0 0
    %186 = vmatpush1.bf16.xpose.msra.mxu0 0
    %187 = vmatprep.subr.bf16.mxu0 0
    %188 = vmatpush1.bf16.xpose.msra.mxu0 0
    %189 = vmatprep.subr.bf16.mxu0 0
    %190 = vmatpush1.bf16.xpose.msra.mxu0 0
    %191 = vmatprep.subr.bf16.mxu0 0
    %192 = vmatpush1.bf16.xpose.msra.mxu0 0
    %193 = vmatprep.subr.bf16.mxu0 0
    %194 = vmatpush1.bf16.xpose.msra.mxu0 0
    %195 = vmatprep.subr.bf16.mxu0 0
    %196 = vmatpush1.bf16.xpose.msra.mxu0 0
    %197 = vmatprep.subr.bf16.mxu0 0
    %198 = vmatpush1.bf16.xpose.msra.mxu0 0
    %199 = vmatprep.subr.bf16.mxu0 0
    %200 = vmatpush1.bf16.xpose.msra.mxu0 0
    %201 = vmatprep.subr.bf16.mxu0 0
    %202 = vmatpush1.bf16.xpose.msra.mxu0 0
    %203 = vmatprep.subr.bf16.mxu0 0
    %204 = vmatpush1.bf16.xpose.msra.mxu0 0
    %205 = vmatprep.subr.bf16.mxu0 0
    %206 = vmatpush1.bf16.xpose.msra.mxu0 0
    %207 = vmatprep.subr.bf16.mxu0 0
    %208 = vmatpush1.bf16.xpose.msra.mxu0 0
    %209 = vmatprep.mubr.bf16.mxu0 0
    %210 = vmatmul.mubr.bf16.gmra.mrb[0].mxu0 %v172
    %v211 = vpop.f32.mrb[0].mxu0
    %v212 = vadd.f32 %v155, %v211
    %v213 = vpop.f32.mrb[0].mxu0
    %v214 = vpop.f32.mrb[0].mxu0
    %v215 = vadd.f32 %v156, %v214
    %v216 = vpop.f32.mrb[0].mxu0
    %217 = vdwg.mxu0
    %vm218 = vcmask 130048
    %v219 = vsel %vm218, %v212, -inf
    %220 = vmax.xlane.f32.xlu0 %v219
    %v221 = vpop.xlane.xlu0 %220
    %v222 = vsel %vm218, %v215, -inf
    %223 = vmax.xlane.f32.xlu0 %v222
    %v224 = vpop.xlane.xlu0 %223
    %v225 = vsub.f32 %v212, %v221
    %v226 = vsub.f32 %v215, %v224
    %v227 = vmul.f32 %v225, 1.442695
    %v228 = vpow.pop %v227
    %v229 = vmul.f32 %v226, 1.442695
    %v230 = vpow.pop %v229
    %v231 = vsel %vm218, %v228, 0.0
    %232 = vadd.xlane.f32.xlu0 %v231
    %v233 = vpop.xlane.xlu0 %232
    %v234 = vsel %vm218, %v230, 0.0
    %235 = vadd.xlane.f32.xlu0 %v234
    %v236 = vpop.xlane.xlu0 %235
    %v237 = vrcp.pop %v233
    %v238 = vrcp.pop %v236
    %v239 = vmul.f32 %v228, %v237
    %v240 = vmul.f32 %v230, %v238
    %v241 = vpack.c.bf16 %v240, %v239
    %242 = vrot.lane.b32.xlu0 %v166, 64
    %v243 = vpop.permute.xlu0 %242
    %v246 = vsel %vm218, %v241, 0
    %248 = vmatprep.subr.bf16.mxu0 0
    %249 = vmatpush1.bf16.msra.mxu0 %v243
    %250 = vmatprep.subr.bf16.mxu0 0
    %251 = vmatpush1.bf16.msra.mxu0 0
    %252 = vmatprep.subr.bf16.mxu0 0
    %253 = vmatpush1.bf16.msra.mxu0 0
    %254 = vmatprep.subr.bf16.mxu0 0
    %255 = vmatpush1.bf16.msra.mxu0 0
    %256 = vmatprep.subr.bf16.mxu0 0
    %257 = vmatpush1.bf16.msra.mxu0 0
    %258 = vmatprep.subr.bf16.mxu0 0
    %259 = vmatpush1.bf16.msra.mxu0 0
    %260 = vmatprep.subr.bf16.mxu0 0
    %261 = vmatpush1.bf16.msra.mxu0 0
    %262 = vmatprep.subr.bf16.mxu0 0
    %263 = vmatpush1.bf16.msra.mxu0 0
    %264 = vmatprep.subr.bf16.mxu0 0
    %265 = vmatpush1.bf16.msra.mxu0 0
    %266 = vmatprep.subr.bf16.mxu0 0
    %267 = vmatpush1.bf16.msra.mxu0 0
    %268 = vmatprep.subr.bf16.mxu0 0
    %269 = vmatpush1.bf16.msra.mxu0 0
    %270 = vmatprep.subr.bf16.mxu0 0
    %271 = vmatpush1.bf16.msra.mxu0 0
    %272 = vmatprep.subr.bf16.mxu0 0
    %273 = vmatpush1.bf16.msra.mxu0 0
    %274 = vmatprep.subr.bf16.mxu0 0
    %275 = vmatpush1.bf16.msra.mxu0 0
    %276 = vmatprep.subr.bf16.mxu0 0
    %277 = vmatpush1.bf16.msra.mxu0 0
    %278 = vmatprep.subr.bf16.mxu0 0
    %279 = vmatpush1.bf16.msra.mxu0 0
    %280 = vmatprep.mubr.bf16.mxu0 0
    %281 = vmatmul.mubr.bf16.gmra.mrb[0].mxu0 %v246
    %v282 = vpop.f32.mrb[0].mxu0
    %v283 = vadd.f32 0.0, %v282
    %v284 = vpop.f32.mrb[0].mxu0
    %v285 = vpop.f32.mrb[0].mxu0
    %v286 = vadd.f32 0.0, %v285
    %v287 = vpop.f32.mrb[0].mxu0
    %288 = vdwg.mxu0
    %v289 = vpack.c.bf16 %v286, %v283
    %v290 = vld [vmem:[%s3] sm:$0xf]
    %v292 = vsel %vm170, %v289, 0
    %vm294 = vcmask 1043456
    %v296 = vsel %vm294, %v290, 0
    %298 = vmatprep.subr.bf16.mxu0 0
    %299 = vmatpush1.bf16.msra.mxu0 %v296
    %300 = vmatprep.subr.bf16.mxu0 0
    %301 = vmatpush1.bf16.msra.mxu0 0
    %302 = vmatprep.subr.bf16.mxu0 0
    %303 = vmatpush1.bf16.msra.mxu0 0
    %304 = vmatprep.subr.bf16.mxu0 0
    %305 = vmatpush1.bf16.msra.mxu0 0
    %306 = vmatprep.subr.bf16.mxu0 0
    %307 = vmatpush1.bf16.msra.mxu0 0
    %308 = vmatprep.subr.bf16.mxu0 0
    %309 = vmatpush1.bf16.msra.mxu0 0
    %310 = vmatprep.subr.bf16.mxu0 0
    %311 = vmatpush1.bf16.msra.mxu0 0
    %312 = vmatprep.subr.bf16.mxu0 0
    %313 = vmatpush1.bf16.msra.mxu0 0
    %314 = vmatprep.subr.bf16.mxu0 0
    %315 = vmatpush1.bf16.msra.mxu0 0
    %316 = vmatprep.subr.bf16.mxu0 0
    %317 = vmatpush1.bf16.msra.mxu0 0
    %318 = vmatprep.subr.bf16.mxu0 0
    %319 = vmatpush1.bf16.msra.mxu0 0
    %320 = vmatprep.subr.bf16.mxu0 0
    %321 = vmatpush1.bf16.msra.mxu0 0
    %322 = vmatprep.subr.bf16.mxu0 0
    %323 = vmatpush1.bf16.msra.mxu0 0
    %324 = vmatprep.subr.bf16.mxu0 0
    %325 = vmatpush1.bf16.msra.mxu0 0
    %326 = vmatprep.subr.bf16.mxu0 0
    %327 = vmatpush1.bf16.msra.mxu0 0
    %328 = vmatprep.subr.bf16.mxu0 0
    %329 = vmatpush1.bf16.msra.mxu0 0
    %330 = vmatprep.mubr.bf16.mxu0 0
    %331 = vmatmul.mubr.bf16.gmra.mrb[0].mxu0 %v292
    %v332 = vpop.f32.mrb[0].mxu0
    %v333 = vadd.f32 0.0, %v332
    %v334 = vpop.f32.mrb[0].mxu0
    %v335 = vpop.f32.mrb[0].mxu0
    %v336 = vadd.f32 0.0, %v335
    %v337 = vpop.f32.mrb[0].mxu0
    %338 = vdwg.mxu0
    %v339 = vadd.f32 %v164, %v333
    %v340 = vadd.f32 %v165, %v336
    %341 = vrot.lane.b32.xlu0 %v166, 120
    %v342 = vpop.permute.xlu0 %341
    %343 = vrot.lane.b32.xlu0 %v166, 88
    %v344 = vpop.permute.xlu0 %343
    %v346 = vsel %vm170, %v342, 0
    %v349 = vsel %vm170, %v344, 0
    %351 = vmatprep.subr.bf16.mxu0 0
    %352 = vmatpush1.bf16.xpose.msra.mxu0 %v349
    %353 = vmatprep.subr.bf16.mxu0 0
    %354 = vmatpush1.bf16.xpose.msra.mxu0 0
    %355 = vmatprep.subr.bf16.mxu0 0
    %356 = vmatpush1.bf16.xpose.msra.mxu0 0
    %357 = vmatprep.subr.bf16.mxu0 0
    %358 = vmatpush1.bf16.xpose.msra.mxu0 0
    %359 = vmatprep.subr.bf16.mxu0 0
    %360 = vmatpush1.bf16.xpose.msra.mxu0 0
    %361 = vmatprep.subr.bf16.mxu0 0
    %362 = vmatpush1.bf16.xpose.msra.mxu0 0
    %363 = vmatprep.subr.bf16.mxu0 0
    %364 = vmatpush1.bf16.xpose.msra.mxu0 0
    %365 = vmatprep.subr.bf16.mxu0 0
    %366 = vmatpush1.bf16.xpose.msra.mxu0 0
    %367 = vmatprep.subr.bf16.mxu0 0
    %368 = vmatpush1.bf16.xpose.msra.mxu0 0
    %369 = vmatprep.subr.bf16.mxu0 0
    %370 = vmatpush1.bf16.xpose.msra.mxu0 0
    %371 = vmatprep.subr.bf16.mxu0 0
    %372 = vmatpush1.bf16.xpose.msra.mxu0 0
    %373 = vmatprep.subr.bf16.mxu0 0
    %374 = vmatpush1.bf16.xpose.msra.mxu0 0
    %375 = vmatprep.subr.bf16.mxu0 0
    %376 = vmatpush1.bf16.xpose.msra.mxu0 0
    %377 = vmatprep.subr.bf16.mxu0 0
    %378 = vmatpush1.bf16.xpose.msra.mxu0 0
    %379 = vmatprep.subr.bf16.mxu0 0
    %380 = vmatpush1.bf16.xpose.msra.mxu0 0
    %381 = vmatprep.subr.bf16.mxu0 0
    %382 = vmatpush1.bf16.xpose.msra.mxu0 0
    %383 = vmatprep.mubr.bf16.mxu0 0
    %384 = vmatmul.mubr.bf16.gmra.mrb[0].mxu0 %v346
    %v385 = vpop.f32.mrb[0].mxu0
    %v386 = vadd.f32 %v155, %v385
    %v387 = vpop.f32.mrb[0].mxu0
    %v388 = vpop.f32.mrb[0].mxu0
    %v389 = vadd.f32 %v156, %v388
    %v390 = vpop.f32.mrb[0].mxu0
    %391 = vdwg.mxu0
    %v392 = vsel %vm218, %v386, -inf
    %393 = vmax.xlane.f32.xlu0 %v392
    %v394 = vpop.xlane.xlu0 %393
    %v395 = vsel %vm218, %v389, -inf
    %396 = vmax.xlane.f32.xlu0 %v395
    %v397 = vpop.xlane.xlu0 %396
    %v398 = vsub.f32 %v386, %v394
    %v399 = vsub.f32 %v389, %v397
    %v400 = vmul.f32 %v398, 1.442695
    %v401 = vpow.pop %v400
    %v402 = vmul.f32 %v399, 1.442695
    %v403 = vpow.pop %v402
    %v404 = vsel %vm218, %v401, 0.0
    %405 = vadd.xlane.f32.xlu0 %v404
    %v406 = vpop.xlane.xlu0 %405
    %v407 = vsel %vm218, %v403, 0.0
    %408 = vadd.xlane.f32.xlu0 %v407
    %v409 = vpop.xlane.xlu0 %408
    %v410 = vrcp.pop %v406
    %v411 = vrcp.pop %v409
    %v412 = vmul.f32 %v401, %v410
    %v413 = vmul.f32 %v403, %v411
    %v414 = vpack.c.bf16 %v413, %v412
    %415 = vrot.lane.b32.xlu0 %v166, 56
    %v416 = vpop.permute.xlu0 %415
    %v419 = vsel %vm218, %v414, 0
    %421 = vmatprep.subr.bf16.mxu0 0
    %422 = vmatpush1.bf16.msra.mxu0 %v416
    %423 = vmatprep.subr.bf16.mxu0 0
    %424 = vmatpush1.bf16.msra.mxu0 0
    %425 = vmatprep.subr.bf16.mxu0 0
    %426 = vmatpush1.bf16.msra.mxu0 0
    %427 = vmatprep.subr.bf16.mxu0 0
    %428 = vmatpush1.bf16.msra.mxu0 0
    %429 = vmatprep.subr.bf16.mxu0 0
    %430 = vmatpush1.bf16.msra.mxu0 0
    %431 = vmatprep.subr.bf16.mxu0 0
    %432 = vmatpush1.bf16.msra.mxu0 0
    %433 = vmatprep.subr.bf16.mxu0 0
    %434 = vmatpush1.bf16.msra.mxu0 0
    %435 = vmatprep.subr.bf16.mxu0 0
    %436 = vmatpush1.bf16.msra.mxu0 0
    %437 = vmatprep.subr.bf16.mxu0 0
    %438 = vmatpush1.bf16.msra.mxu0 0
    %439 = vmatprep.subr.bf16.mxu0 0
    %440 = vmatpush1.bf16.msra.mxu0 0
    %441 = vmatprep.subr.bf16.mxu0 0
    %442 = vmatpush1.bf16.msra.mxu0 0
    %443 = vmatprep.subr.bf16.mxu0 0
    %444 = vmatpush1.bf16.msra.mxu0 0
    %445 = vmatprep.subr.bf16.mxu0 0
    %446 = vmatpush1.bf16.msra.mxu0 0
    %447 = vmatprep.subr.bf16.mxu0 0
    %448 = vmatpush1.bf16.msra.mxu0 0
    %449 = vmatprep.subr.bf16.mxu0 0
    %450 = vmatpush1.bf16.msra.mxu0 0
    %451 = vmatprep.subr.bf16.mxu0 0
    %452 = vmatpush1.bf16.msra.mxu0 0
    %453 = vmatprep.mubr.bf16.mxu0 0
    %454 = vmatmul.mubr.bf16.gmra.mrb[0].mxu0 %v419
    %v455 = vpop.f32.mrb[0].mxu0
    %v456 = vadd.f32 0.0, %v455
    %v457 = vpop.f32.mrb[0].mxu0
    %v458 = vpop.f32.mrb[0].mxu0
    %v459 = vadd.f32 0.0, %v458
    %v460 = vpop.f32.mrb[0].mxu0
    %461 = vdwg.mxu0
    %v462 = vpack.c.bf16 %v459, %v456
    %s463 = scalar_lea.vmem %s3, 4
    %v464 = vld [vmem:[%s463] sm:$0xf]
    %v466 = vsel %vm170, %v462, 0
    %v469 = vsel %vm294, %v464, 0
    %471 = vmatprep.subr.bf16.mxu0 0
    %472 = vmatpush1.bf16.msra.mxu0 %v469
    %473 = vmatprep.subr.bf16.mxu0 0
    %474 = vmatpush1.bf16.msra.mxu0 0
    %475 = vmatprep.subr.bf16.mxu0 0
    %476 = vmatpush1.bf16.msra.mxu0 0
    %477 = vmatprep.subr.bf16.mxu0 0
    %478 = vmatpush1.bf16.msra.mxu0 0
    %479 = vmatprep.subr.bf16.mxu0 0
    %480 = vmatpush1.bf16.msra.mxu0 0
    %481 = vmatprep.subr.bf16.mxu0 0
    %482 = vmatpush1.bf16.msra.mxu0 0
    %483 = vmatprep.subr.bf16.mxu0 0
    %484 = vmatpush1.bf16.msra.mxu0 0
    %485 = vmatprep.subr.bf16.mxu0 0
    %486 = vmatpush1.bf16.msra.mxu0 0
    %487 = vmatprep.subr.bf16.mxu0 0
    %488 = vmatpush1.bf16.msra.mxu0 0
    %489 = vmatprep.subr.bf16.mxu0 0
    %490 = vmatpush1.bf16.msra.mxu0 0
    %491 = vmatprep.subr.bf16.mxu0 0
    %492 = vmatpush1.bf16.msra.mxu0 0
    %493 = vmatprep.subr.bf16.mxu0 0
    %494 = vmatpush1.bf16.msra.mxu0 0
    %495 = vmatprep.subr.bf16.mxu0 0
    %496 = vmatpush1.bf16.msra.mxu0 0
    %497 = vmatprep.subr.bf16.mxu0 0
    %498 = vmatpush1.bf16.msra.mxu0 0
    %499 = vmatprep.subr.bf16.mxu0 0
    %500 = vmatpush1.bf16.msra.mxu0 0
    %501 = vmatprep.subr.bf16.mxu0 0
    %502 = vmatpush1.bf16.msra.mxu0 0
    %503 = vmatprep.mubr.bf16.mxu0 0
    %504 = vmatmul.mubr.bf16.gmra.mrb[0].mxu0 %v466
    %v505 = vpop.f32.mrb[0].mxu0
    %v506 = vadd.f32 0.0, %v505
    %v507 = vpop.f32.mrb[0].mxu0
    %v508 = vpop.f32.mrb[0].mxu0
    %v509 = vadd.f32 0.0, %v508
    %v510 = vpop.f32.mrb[0].mxu0
    %511 = vdwg.mxu0
    %v512 = vadd.f32 %v339, %v506
    %v513 = vadd.f32 %v340, %v509
    %514 = vrot.lane.b32.xlu0 %v166, 112
    %v515 = vpop.permute.xlu0 %514
    %516 = vrot.lane.b32.xlu0 %v166, 80
    %v517 = vpop.permute.xlu0 %516
    %v519 = vsel %vm170, %v515, 0
    %v522 = vsel %vm170, %v517, 0
    %524 = vmatprep.subr.bf16.mxu0 0
    %525 = vmatpush1.bf16.xpose.msra.mxu0 %v522
    %526 = vmatprep.subr.bf16.mxu0 0
    %527 = vmatpush1.bf16.xpose.msra.mxu0 0
    %528 = vmatprep.subr.bf16.mxu0 0
    %529 = vmatpush1.bf16.xpose.msra.mxu0 0
    %530 = vmatprep.subr.bf16.mxu0 0
    %531 = vmatpush1.bf16.xpose.msra.mxu0 0
    %532 = vmatprep.subr.bf16.mxu0 0
    %533 = vmatpush1.bf16.xpose.msra.mxu0 0
    %534 = vmatprep.subr.bf16.mxu0 0
    %535 = vmatpush1.bf16.xpose.msra.mxu0 0
    %536 = vmatprep.subr.bf16.mxu0 0
    %537 = vmatpush1.bf16.xpose.msra.mxu0 0
    %538 = vmatprep.subr.bf16.mxu0 0
    %539 = vmatpush1.bf16.xpose.msra.mxu0 0
    %540 = vmatprep.subr.bf16.mxu0 0
    %541 = vmatpush1.bf16.xpose.msra.mxu0 0
    %542 = vmatprep.subr.bf16.mxu0 0
    %543 = vmatpush1.bf16.xpose.msra.mxu0 0
    %544 = vmatprep.subr.bf16.mxu0 0
    %545 = vmatpush1.bf16.xpose.msra.mxu0 0
    %546 = vmatprep.subr.bf16.mxu0 0
    %547 = vmatpush1.bf16.xpose.msra.mxu0 0
    %548 = vmatprep.subr.bf16.mxu0 0
    %549 = vmatpush1.bf16.xpose.msra.mxu0 0
    %550 = vmatprep.subr.bf16.mxu0 0
    %551 = vmatpush1.bf16.xpose.msra.mxu0 0
    %552 = vmatprep.subr.bf16.mxu0 0
    %553 = vmatpush1.bf16.xpose.msra.mxu0 0
    %554 = vmatprep.subr.bf16.mxu0 0
    %555 = vmatpush1.bf16.xpose.msra.mxu0 0
    %556 = vmatprep.mubr.bf16.mxu0 0
    %557 = vmatmul.mubr.bf16.gmra.mrb[0].mxu0 %v519
    %v558 = vpop.f32.mrb[0].mxu0
    %v559 = vadd.f32 %v155, %v558
    %v560 = vpop.f32.mrb[0].mxu0
    %v561 = vpop.f32.mrb[0].mxu0
    %v562 = vadd.f32 %v156, %v561
    %v563 = vpop.f32.mrb[0].mxu0
    %564 = vdwg.mxu0
    %v565 = vsel %vm218, %v559, -inf
    %566 = vmax.xlane.f32.xlu0 %v565
    %v567 = vpop.xlane.xlu0 %566
    %v568 = vsel %vm218, %v562, -inf
    %569 = vmax.xlane.f32.xlu0 %v568
    %v570 = vpop.xlane.xlu0 %569
    %v571 = vsub.f32 %v559, %v567
    %v572 = vsub.f32 %v562, %v570
    %v573 = vmul.f32 %v571, 1.442695
    %v574 = vpow.pop %v573
    %v575 = vmul.f32 %v572, 1.442695
    %v576 = vpow.pop %v575
    %v577 = vsel %vm218, %v574, 0.0
    %578 = vadd.xlane.f32.xlu0 %v577
    %v579 = vpop.xlane.xlu0 %578
    %v580 = vsel %vm218, %v576, 0.0
    %581 = vadd.xlane.f32.xlu0 %v580
    %v582 = vpop.xlane.xlu0 %581
    %v583 = vrcp.pop %v579
    %v584 = vrcp.pop %v582
    %v585 = vmul.f32 %v574, %v583
    %v586 = vmul.f32 %v576, %v584
    %v587 = vpack.c.bf16 %v586, %v585
    %588 = vrot.lane.b32.xlu0 %v166, 48
    %v589 = vpop.permute.xlu0 %588
    %v592 = vsel %vm218, %v587, 0
    %594 = vmatprep.subr.bf16.mxu0 0
    %595 = vmatpush1.bf16.msra.mxu0 %v589
    %596 = vmatprep.subr.bf16.mxu0 0
    %597 = vmatpush1.bf16.msra.mxu0 0
    %598 = vmatprep.subr.bf16.mxu0 0
    %599 = vmatpush1.bf16.msra.mxu0 0
    %600 = vmatprep.subr.bf16.mxu0 0
    %601 = vmatpush1.bf16.msra.mxu0 0
    %602 = vmatprep.subr.bf16.mxu0 0
    %603 = vmatpush1.bf16.msra.mxu0 0
    %604 = vmatprep.subr.bf16.mxu0 0
    %605 = vmatpush1.bf16.msra.mxu0 0
    %606 = vmatprep.subr.bf16.mxu0 0
    %607 = vmatpush1.bf16.msra.mxu0 0
    %608 = vmatprep.subr.bf16.mxu0 0
    %609 = vmatpush1.bf16.msra.mxu0 0
    %610 = vmatprep.subr.bf16.mxu0 0
    %611 = vmatpush1.bf16.msra.mxu0 0
    %612 = vmatprep.subr.bf16.mxu0 0
    %613 = vmatpush1.bf16.msra.mxu0 0
    %614 = vmatprep.subr.bf16.mxu0 0
    %615 = vmatpush1.bf16.msra.mxu0 0
    %616 = vmatprep.subr.bf16.mxu0 0
    %617 = vmatpush1.bf16.msra.mxu0 0
    %618 = vmatprep.subr.bf16.mxu0 0
    %619 = vmatpush1.bf16.msra.mxu0 0
    %620 = vmatprep.subr.bf16.mxu0 0
    %621 = vmatpush1.bf16.msra.mxu0 0
    %622 = vmatprep.subr.bf16.mxu0 0
    %623 = vmatpush1.bf16.msra.mxu0 0
    %624 = vmatprep.subr.bf16.mxu0 0
    %625 = vmatpush1.bf16.msra.mxu0 0
    %626 = vmatprep.mubr.bf16.mxu0 0
    %627 = vmatmul.mubr.bf16.gmra.mrb[0].mxu0 %v592
    %v628 = vpop.f32.mrb[0].mxu0
    %v629 = vadd.f32 0.0, %v628
    %v630 = vpop.f32.mrb[0].mxu0
    %v631 = vpop.f32.mrb[0].mxu0
    %v632 = vadd.f32 0.0, %v631
    %v633 = vpop.f32.mrb[0].mxu0
    %634 = vdwg.mxu0
    %v635 = vpack.c.bf16 %v632, %v629
    %s636 = scalar_lea.vmem %s3, 8
    %v637 = vld [vmem:[%s636] sm:$0xf]
    %v639 = vsel %vm170, %v635, 0
    %v642 = vsel %vm294, %v637, 0
    %644 = vmatprep.subr.bf16.mxu0 0
    %645 = vmatpush1.bf16.msra.mxu0 %v642
    %646 = vmatprep.subr.bf16.mxu0 0
    %647 = vmatpush1.bf16.msra.mxu0 0
    %648 = vmatprep.subr.bf16.mxu0 0
    %649 = vmatpush1.bf16.msra.mxu0 0
    %650 = vmatprep.subr.bf16.mxu0 0
    %651 = vmatpush1.bf16.msra.mxu0 0
    %652 = vmatprep.subr.bf16.mxu0 0
    %653 = vmatpush1.bf16.msra.mxu0 0
    %654 = vmatprep.subr.bf16.mxu0 0
    %655 = vmatpush1.bf16.msra.mxu0 0
    %656 = vmatprep.subr.bf16.mxu0 0
    %657 = vmatpush1.bf16.msra.mxu0 0
    %658 = vmatprep.subr.bf16.mxu0 0
    %659 = vmatpush1.bf16.msra.mxu0 0
    %660 = vmatprep.subr.bf16.mxu0 0
    %661 = vmatpush1.bf16.msra.mxu0 0
    %662 = vmatprep.subr.bf16.mxu0 0
    %663 = vmatpush1.bf16.msra.mxu0 0
    %664 = vmatprep.subr.bf16.mxu0 0
    %665 = vmatpush1.bf16.msra.mxu0 0
    %666 = vmatprep.subr.bf16.mxu0 0
    %667 = vmatpush1.bf16.msra.mxu0 0
    %668 = vmatprep.subr.bf16.mxu0 0
    %669 = vmatpush1.bf16.msra.mxu0 0
    %670 = vmatprep.subr.bf16.mxu0 0
    %671 = vmatpush1.bf16.msra.mxu0 0
    %672 = vmatprep.subr.bf16.mxu0 0
    %673 = vmatpush1.bf16.msra.mxu0 0
    %674 = vmatprep.subr.bf16.mxu0 0
    %675 = vmatpush1.bf16.msra.mxu0 0
    %676 = vmatprep.mubr.bf16.mxu0 0
    %677 = vmatmul.mubr.bf16.gmra.mrb[0].mxu0 %v639
    %v678 = vpop.f32.mrb[0].mxu0
    %v679 = vadd.f32 0.0, %v678
    %v680 = vpop.f32.mrb[0].mxu0
    %v681 = vpop.f32.mrb[0].mxu0
    %v682 = vadd.f32 0.0, %v681
    %v683 = vpop.f32.mrb[0].mxu0
    %684 = vdwg.mxu0
    %v685 = vadd.f32 %v512, %v679
    %v686 = vadd.f32 %v513, %v682
    %687 = vrot.lane.b32.xlu0 %v166, 104
    %v688 = vpop.permute.xlu0 %687
    %689 = vrot.lane.b32.xlu0 %v166, 72
    %v690 = vpop.permute.xlu0 %689
    %v692 = vsel %vm170, %v688, 0
    %v695 = vsel %vm170, %v690, 0
    %697 = vmatprep.subr.bf16.mxu0 0
    %698 = vmatpush1.bf16.xpose.msra.mxu0 %v695
    %699 = vmatprep.subr.bf16.mxu0 0
    %700 = vmatpush1.bf16.xpose.msra.mxu0 0
    %701 = vmatprep.subr.bf16.mxu0 0
    %702 = vmatpush1.bf16.xpose.msra.mxu0 0
    %703 = vmatprep.subr.bf16.mxu0 0
    %704 = vmatpush1.bf16.xpose.msra.mxu0 0
    %705 = vmatprep.subr.bf16.mxu0 0
    %706 = vmatpush1.bf16.xpose.msra.mxu0 0
    %707 = vmatprep.subr.bf16.mxu0 0
    %708 = vmatpush1.bf16.xpose.msra.mxu0 0
    %709 = vmatprep.subr.bf16.mxu0 0
    %710 = vmatpush1.bf16.xpose.msra.mxu0 0
    %711 = vmatprep.subr.bf16.mxu0 0
    %712 = vmatpush1.bf16.xpose.msra.mxu0 0
    %713 = vmatprep.subr.bf16.mxu0 0
    %714 = vmatpush1.bf16.xpose.msra.mxu0 0
    %715 = vmatprep.subr.bf16.mxu0 0
    %716 = vmatpush1.bf16.xpose.msra.mxu0 0
    %717 = vmatprep.subr.bf16.mxu0 0
    %718 = vmatpush1.bf16.xpose.msra.mxu0 0
    %719 = vmatprep.subr.bf16.mxu0 0
    %720 = vmatpush1.bf16.xpose.msra.mxu0 0
    %721 = vmatprep.subr.bf16.mxu0 0
    %722 = vmatpush1.bf16.xpose.msra.mxu0 0
    %723 = vmatprep.subr.bf16.mxu0 0
    %724 = vmatpush1.bf16.xpose.msra.mxu0 0
    %725 = vmatprep.subr.bf16.mxu0 0
    %726 = vmatpush1.bf16.xpose.msra.mxu0 0
    %727 = vmatprep.subr.bf16.mxu0 0
    %728 = vmatpush1.bf16.xpose.msra.mxu0 0
    %729 = vmatprep.mubr.bf16.mxu0 0
    %730 = vmatmul.mubr.bf16.gmra.mrb[0].mxu0 %v692
    %v731 = vpop.f32.mrb[0].mxu0
    %v732 = vadd.f32 %v155, %v731
    %v733 = vpop.f32.mrb[0].mxu0
    %v734 = vpop.f32.mrb[0].mxu0
    %v735 = vadd.f32 %v156, %v734
    %v736 = vpop.f32.mrb[0].mxu0
    %737 = vdwg.mxu0
    %v738 = vsel %vm218, %v732, -inf
    %739 = vmax.xlane.f32.xlu0 %v738
    %v740 = vpop.xlane.xlu0 %739
    %v741 = vsel %vm218, %v735, -inf
    %742 = vmax.xlane.f32.xlu0 %v741
    %v743 = vpop.xlane.xlu0 %742
    %v744 = vsub.f32 %v732, %v740
    %v745 = vsub.f32 %v735, %v743
    %v746 = vmul.f32 %v744, 1.442695
    %v747 = vpow.pop %v746
    %v748 = vmul.f32 %v745, 1.442695
    %v749 = vpow.pop %v748
    %v750 = vsel %vm218, %v747, 0.0
    %751 = vadd.xlane.f32.xlu0 %v750
    %v752 = vpop.xlane.xlu0 %751
    %v753 = vsel %vm218, %v749, 0.0
    %754 = vadd.xlane.f32.xlu0 %v753
    %v755 = vpop.xlane.xlu0 %754
    %v756 = vrcp.pop %v752
    %v757 = vrcp.pop %v755
    %v758 = vmul.f32 %v747, %v756
    %v759 = vmul.f32 %v749, %v757
    %v760 = vpack.c.bf16 %v759, %v758
    %761 = vrot.lane.b32.xlu0 %v166, 40
    %v762 = vpop.permute.xlu0 %761
    %v765 = vsel %vm218, %v760, 0
    %767 = vmatprep.subr.bf16.mxu0 0
    %768 = vmatpush1.bf16.msra.mxu0 %v762
    %769 = vmatprep.subr.bf16.mxu0 0
    %770 = vmatpush1.bf16.msra.mxu0 0
    %771 = vmatprep.subr.bf16.mxu0 0
    %772 = vmatpush1.bf16.msra.mxu0 0
    %773 = vmatprep.subr.bf16.mxu0 0
    %774 = vmatpush1.bf16.msra.mxu0 0
    %775 = vmatprep.subr.bf16.mxu0 0
    %776 = vmatpush1.bf16.msra.mxu0 0
    %777 = vmatprep.subr.bf16.mxu0 0
    %778 = vmatpush1.bf16.msra.mxu0 0
    %779 = vmatprep.subr.bf16.mxu0 0
    %780 = vmatpush1.bf16.msra.mxu0 0
    %781 = vmatprep.subr.bf16.mxu0 0
    %782 = vmatpush1.bf16.msra.mxu0 0
    %783 = vmatprep.subr.bf16.mxu0 0
    %784 = vmatpush1.bf16.msra.mxu0 0
    %785 = vmatprep.subr.bf16.mxu0 0
    %786 = vmatpush1.bf16.msra.mxu0 0
    %787 = vmatprep.subr.bf16.mxu0 0
    %788 = vmatpush1.bf16.msra.mxu0 0
    %789 = vmatprep.subr.bf16.mxu0 0
    %790 = vmatpush1.bf16.msra.mxu0 0
    %791 = vmatprep.subr.bf16.mxu0 0
    %792 = vmatpush1.bf16.msra.mxu0 0
    %793 = vmatprep.subr.bf16.mxu0 0
    %794 = vmatpush1.bf16.msra.mxu0 0
    %795 = vmatprep.subr.bf16.mxu0 0
    %796 = vmatpush1.bf16.msra.mxu0 0
    %797 = vmatprep.subr.bf16.mxu0 0
    %798 = vmatpush1.bf16.msra.mxu0 0
    %799 = vmatprep.mubr.bf16.mxu0 0
    %800 = vmatmul.mubr.bf16.gmra.mrb[0].mxu0 %v765
    %v801 = vpop.f32.mrb[0].mxu0
    %v802 = vadd.f32 0.0, %v801
    %v803 = vpop.f32.mrb[0].mxu0
    %v804 = vpop.f32.mrb[0].mxu0
    %v805 = vadd.f32 0.0, %v804
    %v806 = vpop.f32.mrb[0].mxu0
    %807 = vdwg.mxu0
    %v808 = vpack.c.bf16 %v805, %v802
    %s809 = scalar_lea.vmem %s3, 12
    %v810 = vld [vmem:[%s809] sm:$0xf]
    %v812 = vsel %vm170, %v808, 0
    %v815 = vsel %vm294, %v810, 0
    %817 = vmatprep.subr.bf16.mxu0 0
    %818 = vmatpush1.bf16.msra.mxu0 %v815
    %819 = vmatprep.subr.bf16.mxu0 0
    %820 = vmatpush1.bf16.msra.mxu0 0
    %821 = vmatprep.subr.bf16.mxu0 0
    %822 = vmatpush1.bf16.msra.mxu0 0
    %823 = vmatprep.subr.bf16.mxu0 0
    %824 = vmatpush1.bf16.msra.mxu0 0
    %825 = vmatprep.subr.bf16.mxu0 0
    %826 = vmatpush1.bf16.msra.mxu0 0
    %827 = vmatprep.subr.bf16.mxu0 0
    %828 = vmatpush1.bf16.msra.mxu0 0
    %829 = vmatprep.subr.bf16.mxu0 0
    %830 = vmatpush1.bf16.msra.mxu0 0
    %831 = vmatprep.subr.bf16.mxu0 0
    %832 = vmatpush1.bf16.msra.mxu0 0
    %833 = vmatprep.subr.bf16.mxu0 0
    %834 = vmatpush1.bf16.msra.mxu0 0
    %835 = vmatprep.subr.bf16.mxu0 0
    %836 = vmatpush1.bf16.msra.mxu0 0
    %837 = vmatprep.subr.bf16.mxu0 0
    %838 = vmatpush1.bf16.msra.mxu0 0
    %839 = vmatprep.subr.bf16.mxu0 0
    %840 = vmatpush1.bf16.msra.mxu0 0
    %841 = vmatprep.subr.bf16.mxu0 0
    %842 = vmatpush1.bf16.msra.mxu0 0
    %843 = vmatprep.subr.bf16.mxu0 0
    %844 = vmatpush1.bf16.msra.mxu0 0
    %845 = vmatprep.subr.bf16.mxu0 0
    %846 = vmatpush1.bf16.msra.mxu0 0
    %847 = vmatprep.subr.bf16.mxu0 0
    %848 = vmatpush1.bf16.msra.mxu0 0
    %849 = vmatprep.mubr.bf16.mxu0 0
    %850 = vmatmul.mubr.bf16.gmra.mrb[0].mxu0 %v812
    %v851 = vpop.f32.mrb[0].mxu0
    %v852 = vadd.f32 0.0, %v851
    %v853 = vpop.f32.mrb[0].mxu0
    %v854 = vpop.f32.mrb[0].mxu0
    %v855 = vadd.f32 0.0, %v854
    %v856 = vpop.f32.mrb[0].mxu0
    %857 = vdwg.mxu0
    %v858 = vadd.f32 %v685, %v852
    %v859 = vadd.f32 %v686, %v855
    %v860 = vld [vmem:[%s11] sm:$0x1]
    %v861 = vld [vmem:[%s12] sm:$0x1]
    %v862 = vsel %vm50, %v858, 0.0
    %863 = vadd.xlane.f32.xlu0 %v862
    %v864 = vpop.xlane.xlu0 %863
    %v865 = vsel %vm50, %v859, 0.0
    %866 = vadd.xlane.f32.xlu0 %v865
    %v867 = vpop.xlane.xlu0 %866
    %v868 = vmul.f32 %v864, %v57
    %v869 = vmul.f32 %v867, %v57
    %v870 = vsub.f32 %v858, %v868
    %v871 = vsub.f32 %v859, %v869
    %v872 = vmul.f32 %v870, %v870
    %v873 = vmul.f32 %v871, %v871
    %v874 = vsel %vm50, %v872, 0.0
    %875 = vadd.xlane.f32.xlu0 %v874
    %v876 = vpop.xlane.xlu0 %875
    %v877 = vsel %vm50, %v873, 0.0
    %878 = vadd.xlane.f32.xlu0 %v877
    %v879 = vpop.xlane.xlu0 %878
    %v880 = vmul.f32 %v876, %v57
    %v881 = vmul.f32 %v879, %v57
    %v882 = vadd.f32 %v880, 1e-05
    %v883 = vadd.f32 %v881, 1e-05
    %v884 = vrsqrt.pop %v882
    %v885 = vrsqrt.pop %v883
    %v886 = vmul.f32 %v870, %v884
    %v887 = vmul.f32 %v871, %v885
    %v889 = vlaneseq
    %v890 = vshrl.u32 %v889, 7
    %v891 = vsub.s32 0, %v890
    %v892 = vrot.slane %v860, %v891
    %v894 = vmul.f32 %v886, %v892
    %v895 = vmul.f32 %v887, %v892
    %v897 = vlaneseq
    %v898 = vshrl.u32 %v897, 7
    %v899 = vsub.s32 0, %v898
    %v900 = vrot.slane %v861, %v899
    %v902 = vadd.f32 %v894, %v900
    %v903 = vadd.f32 %v895, %v900
    %v904 = vpack.c.bf16 %v903, %v902
    %v905 = vld [vmem:[%s5] sm:$0xf]
    %v906 = vld [vmem:[%s5 + $0x4] sm:$0xf]
    %v907 = vld [vmem:[%s5 + $0x8] sm:$0xf]
    %v908 = vld [vmem:[%s5 + $0xc] sm:$0xf]
    %v909 = vld [vmem:[%s6] sm:$0x1]
    %v911 = vlaneseq
    %v912 = vshrl.u32 %v911, 7
    %v913 = vsub.s32 0, %v912
    %v914 = vrot.slane %v909, %v913
    %v920 = vunpack.c.l.b16 %v905
    %v921 = vunpack.c.l.b16 %v906
    %v922 = vunpack.c.l.b16 %v907
    %v923 = vunpack.c.l.b16 %v908
    %v924 = vpack.c.b16 %v921, %v920
    %v925 = vpack.c.b16 %v923, %v922
    %v929 = vsel %vm50, %v904, 0
    %931 = vmatprep.subr.bf16.mxu0 0
    %932 = vmatpush1.bf16.msra.mxu0 %v924
    %933 = vmatprep.subr.bf16.mxu0 0
    %934 = vmatpush1.bf16.msra.mxu0 %v925
    %935 = vmatprep.subr.bf16.mxu0 0
    %936 = vmatpush1.bf16.msra.mxu0 0
    %937 = vmatprep.subr.bf16.mxu0 0
    %938 = vmatpush1.bf16.msra.mxu0 0
    %939 = vmatprep.subr.bf16.mxu0 0
    %940 = vmatpush1.bf16.msra.mxu0 0
    %941 = vmatprep.subr.bf16.mxu0 0
    %942 = vmatpush1.bf16.msra.mxu0 0
    %943 = vmatprep.subr.bf16.mxu0 0
    %944 = vmatpush1.bf16.msra.mxu0 0
    %945 = vmatprep.subr.bf16.mxu0 0
    %946 = vmatpush1.bf16.msra.mxu0 0
    %947 = vmatprep.subr.bf16.mxu0 0
    %948 = vmatpush1.bf16.msra.mxu0 0
    %949 = vmatprep.subr.bf16.mxu0 0
    %950 = vmatpush1.bf16.msra.mxu0 0
    %951 = vmatprep.subr.bf16.mxu0 0
    %952 = vmatpush1.bf16.msra.mxu0 0
    %953 = vmatprep.subr.bf16.mxu0 0
    %954 = vmatpush1.bf16.msra.mxu0 0
    %955 = vmatprep.subr.bf16.mxu0 0
    %956 = vmatpush1.bf16.msra.mxu0 0
    %957 = vmatprep.subr.bf16.mxu0 0
    %958 = vmatpush1.bf16.msra.mxu0 0
    %959 = vmatprep.subr.bf16.mxu0 0
    %960 = vmatpush1.bf16.msra.mxu0 0
    %961 = vmatprep.subr.bf16.mxu0 0
    %962 = vmatpush1.bf16.msra.mxu0 0
    %963 = vmatprep.mubr.bf16.mxu0 0
    %964 = vmatmul.mubr.bf16.gmra.mrb[0].mxu0 %v929
    %v965 = vpop.f32.mrb[0].mxu0
    %v966 = vadd.f32 %v914, %v965
    %v967 = vpop.f32.mrb[0].mxu0
    %v968 = vpop.f32.mrb[0].mxu0
    %v969 = vadd.f32 %v914, %v968
    %v970 = vpop.f32.mrb[0].mxu0
    %971 = vdwg.mxu0
    %v972 = vmax.f32 %v966, 0.0
    %v973 = vmax.f32 %v969, 0.0
    %v974 = vpack.c.bf16 %v973, %v972
    %v975 = vld [vmem:[%s7] sm:$0xf]
    %v976 = vld [vmem:[%s7 + $0x4] sm:$0xf]
    %v977 = vld [vmem:[%s7 + $0x8] sm:$0xf]
    %v978 = vld [vmem:[%s7 + $0xc] sm:$0xf]
    %v979 = vld [vmem:[%s7 + $0x10] sm:$0xf]
    %v980 = vld [vmem:[%s7 + $0x14] sm:$0xf]
    %v981 = vld [vmem:[%s7 + $0x18] sm:$0xf]
    %v982 = vld [vmem:[%s7 + $0x1c] sm:$0xf]
    %v983 = vld [vmem:[%s7 + $0x20] sm:$0xf]
    %v984 = vld [vmem:[%s7 + $0x24] sm:$0xf]
    %v985 = vld [vmem:[%s7 + $0x28] sm:$0xf]
    %v986 = vld [vmem:[%s7 + $0x2c] sm:$0xf]
    %v987 = vld [vmem:[%s7 + $0x30] sm:$0xf]
    %v988 = vld [vmem:[%s7 + $0x34] sm:$0xf]
    %v989 = vld [vmem:[%s7 + $0x38] sm:$0xf]
    %v990 = vld [vmem:[%s7 + $0x3c] sm:$0xf]
    %v991 = vld [vmem:[%s8] sm:$0x1]
    %v993 = vlaneseq
    %v994 = vshrl.u32 %v993, 7
    %v995 = vsub.s32 0, %v994
    %v996 = vrot.slane %v991, %v995
    %v1014 = vunpack.c.l.b16 %v975
    %v1015 = vunpack.c.l.b16 %v976
    %v1016 = vunpack.c.l.b16 %v977
    %v1017 = vunpack.c.l.b16 %v978
    %v1018 = vunpack.c.l.b16 %v979
    %v1019 = vunpack.c.l.b16 %v980
    %v1020 = vunpack.c.l.b16 %v981
    %v1021 = vunpack.c.l.b16 %v982
    %v1022 = vunpack.c.l.b16 %v983
    %v1023 = vunpack.c.l.b16 %v984
    %v1024 = vunpack.c.l.b16 %v985
    %v1025 = vunpack.c.l.b16 %v986
    %v1026 = vunpack.c.l.b16 %v987
    %v1027 = vunpack.c.l.b16 %v988
    %v1028 = vunpack.c.l.b16 %v989
    %v1029 = vunpack.c.l.b16 %v990
    %v1030 = vpack.c.b16 %v1015, %v1014
    %v1031 = vpack.c.b16 %v1017, %v1016
    %v1032 = vpack.c.b16 %v1019, %v1018
    %v1033 = vpack.c.b16 %v1021, %v1020
    %v1034 = vpack.c.b16 %v1023, %v1022
    %v1035 = vpack.c.b16 %v1025, %v1024
    %v1036 = vpack.c.b16 %v1027, %v1026
    %v1037 = vpack.c.b16 %v1029, %v1028
    %1046 = vmatprep.subr.bf16.mxu0 0
    %1047 = vmatpush1.bf16.msra.mxu0 %v1030
    %1048 = vmatprep.subr.bf16.mxu0 0
    %1049 = vmatpush1.bf16.msra.mxu0 %v1031
    %1050 = vmatprep.subr.bf16.mxu0 0
    %1051 = vmatpush1.bf16.msra.mxu0 %v1032
    %1052 = vmatprep.subr.bf16.mxu0 0
    %1053 = vmatpush1.bf16.msra.mxu0 %v1033
    %1054 = vmatprep.subr.bf16.mxu0 0
    %1055 = vmatpush1.bf16.msra.mxu0 %v1034
    %1056 = vmatprep.subr.bf16.mxu0 0
    %1057 = vmatpush1.bf16.msra.mxu0 %v1035
    %1058 = vmatprep.subr.bf16.mxu0 0
    %1059 = vmatpush1.bf16.msra.mxu0 %v1036
    %1060 = vmatprep.subr.bf16.mxu0 0
    %1061 = vmatpush1.bf16.msra.mxu0 %v1037
    %1062 = vmatprep.subr.bf16.mxu0 0
    %1063 = vmatpush1.bf16.msra.mxu0 0
    %1064 = vmatprep.subr.bf16.mxu0 0
    %1065 = vmatpush1.bf16.msra.mxu0 0
    %1066 = vmatprep.subr.bf16.mxu0 0
    %1067 = vmatpush1.bf16.msra.mxu0 0
    %1068 = vmatprep.subr.bf16.mxu0 0
    %1069 = vmatpush1.bf16.msra.mxu0 0
    %1070 = vmatprep.subr.bf16.mxu0 0
    %1071 = vmatpush1.bf16.msra.mxu0 0
    %1072 = vmatprep.subr.bf16.mxu0 0
    %1073 = vmatpush1.bf16.msra.mxu0 0
    %1074 = vmatprep.subr.bf16.mxu0 0
    %1075 = vmatpush1.bf16.msra.mxu0 0
    %1076 = vmatprep.subr.bf16.mxu0 0
    %1077 = vmatpush1.bf16.msra.mxu0 0
    %1078 = vmatprep.mubr.bf16.mxu0 0
    %1079 = vmatmul.mubr.bf16.gmra.mrb[0].mxu0 %v974
    %v1080 = vpop.f32.mrb[0].mxu0
    %v1081 = vadd.f32 %v996, %v1080
    %v1082 = vpop.f32.mrb[0].mxu0
    %v1083 = vpop.f32.mrb[0].mxu0
    %v1084 = vadd.f32 %v996, %v1083
    %v1085 = vpop.f32.mrb[0].mxu0
    %1086 = vdwg.mxu0
    %v1087 = vadd.f32 %v858, %v1081
    %v1088 = vadd.f32 %v859, %v1084
    %1089 = vst.msk [vmem:[#allocation2] sm:$0xff] %vm50, %v1087
    %1090 = vst.msk [vmem:[#allocation2 + $0x8] sm:$0xff] %vm50, %v1088
    // Predicated region
    $region54: #{transformer_block.1} parent=1 // pred_check
      _
    $region55: #{transformer_block.1} parent=1 // pred_check_branch
      %1092 = sbr.rel (0) target = $region57
    $region56: #{transformer_block.1} parent=1 // pred_region
      %s1094 = ssub.s32 256, 256
      %1095 = vsyncadd [#allocation3], %s1094
      %s1096 = sshll.u32 [#allocation2], 4
      %s1097 = int_to_ptr.vmem [resolvable:$true] %s1096
      %1102 = dma.vmem_to_hbm [thread:$0]  %s1097, 256, %s13, [#allocation3], 128, 128, 8
    $region57: #{transformer_block.1} parent=1 // pred_fallthru
      _
    // Predicated region
    $region58: #{transformer_block.1} parent=1 // pred_check
      _
    $region59: #{transformer_block.1} parent=1 // pred_check_branch
      %1104 = sbr.rel (0) target = $region61
    $region60: #{transformer_block.1} parent=1 // pred_region
      %1105 = dma.done [#allocation3], 256
    $region61: #{transformer_block.1} parent=1 // pred_fallthru
      _
    %1106 = vsyncpa [#allocation3], 1

</llo_original>
